<compile_context>
chip_gen: v7x
topology: tpu7x:2x2x1
jax: 0.10.0
libtpu: 0.0.40
codegen_flags: <defaults>
</compile_context>

<pallas_src>
import math
import numpy as np
import jax
import jax.numpy as jnp
from jax import lax
from jax.experimental import pallas as pl
from jax.experimental.pallas import tpu as pltpu  # noqa: F401  (TPU backend)

# ----------------------------- config (small) --------------------------------
BATCH = 2
VOCAB = 16
EMBED_DIM = 16
MAX_LEN = 17                       # conv(len=17,k=4,p=1) -> 16 -> pool(4) -> 4
CONV_CH = 16
KSIZE = 4
CONV_LEN = MAX_LEN - 1             # 16
POOL = 4
POOL_T = CONV_LEN // POOL          # 4   == int((max_len-1)/4)
LSTM_H = 16
ATT_D = 2 * LSTM_H                 # 32  (bidirectional LSTM output width)
ATT_OUT = ATT_D * POOL_T           # 128 == lstm_out*2*int((max_len-1)/4)
HIDDEN = 32
OUTPUT_DIM = 1


# ------------------------------ fused Pallas kernel ---------------------------
def neurlux_kernel(win_ref, w2_ref, cb2_ref, wih_ref, bih_ref, whh_ref,
                   wqkv_ref, bqkv_ref, fc1w_ref, fc1b_ref, fc2w_ref, fc2b_ref,
                   out_ref):
    f32 = jnp.float32
    BT = BATCH * POOL_T                                   # 8 rows, t-major (row = t*B + b)

    # ---- embedding + Conv1d(k=4, pad=1) folded into ONE im2col matmul ----
    # one-hot over (pool position p, tap k, token id): column = p*K*V + k*V + id
    n_cols = POOL * KSIZE * VOCAB                         # 256
    col_iota = lax.broadcasted_iota(jnp.int32, (BT, n_cols), 1)
    hot = col_iota == win_ref[:, 0:1]
    for u in range(1, POOL * KSIZE):                      # disjoint column ranges -> OR == one-hot sum
        hot = hot | (col_iota == win_ref[:, u:u + 1])
    y = jnp.dot(hot.astype(f32), w2_ref[...], preferred_element_type=f32) + cb2_ref[...]
    y = jnp.maximum(y, 0.0)                               # [8, POOL*C] = [8, 64]

    # ---- MaxPool1d(4): pure lane-sliced maxima (ReLU and max commute) ----
    pooled = jnp.maximum(
        jnp.maximum(y[:, 0:CONV_CH], y[:, CONV_CH:2 * CONV_CH]),
        jnp.maximum(y[:, 2 * CONV_CH:3 * CONV_CH], y[:, 3 * CONV_CH:4 * CONV_CH]))
    # pooled: [B*T, C] = [8, 16], row = t*BATCH + b

    # ---- bi-LSTM: fwd + rev + batch merged into ONE [2,128] recurrence ----
    xp = jnp.dot(pooled, wih_ref[...], preferred_element_type=f32) + bih_ref[...]   # [8, 8H]
    whh = whh_ref[...]                                                               # [2H, 8H]
    lane_g = lax.broadcasted_iota(jnp.int32, (BATCH, 8 * LSTM_H), 1)
    fwd_mask = (lane_g % (2 * LSTM_H)) < LSTM_H           # fwd half of each gate block
    cell_mask = (lane_g >= 4 * LSTM_H) & (lane_g < 6 * LSTM_H)   # the tanh ('g') gate block
    h = jnp.zeros((BATCH, 2 * LSTM_H), f32)               # lanes [fwd H | rev H]
    c = jnp.zeros((BATCH, 2 * LSTM_H), f32)
    h_steps = [None] * POOL_T
    for s in range(POOL_T):                               # static unrolled, T = 4
        xf = xp[s * BATCH:(s + 1) * BATCH, :]                        # fwd input @ time s
        xr = xp[(POOL_T - 1 - s) * BATCH:(POOL_T - s) * BATCH, :]    # rev input @ time T-1-s
        g = jnp.where(fwd_mask, xf, xr) + jnp.dot(h, whh, preferred_element_type=f32)
        # whole-vreg activations: sigmoid(x) = 0.5*(tanh(0.5x)+1); cell gate uses tanh
        act = jnp.where(cell_mask, jnp.tanh(g), 0.5 * (jnp.tanh(0.5 * g) + 1.0))
        i_g = act[:, 0:2 * LSTM_H]
        f_g = act[:, 2 * LSTM_H:4 * LSTM_H]
        g_g = act[:, 4 * LSTM_H:6 * LSTM_H]
        o_g = act[:, 6 * LSTM_H:8 * LSTM_H]
        c = f_g * c + i_g * g_g
        h = o_g * jnp.tanh(c)
        h_steps[s] = h
    # seq[tau] = [fwd h at step tau | rev h at step T-1-tau]
    lane_a = lax.broadcasted_iota(jnp.int32, (BATCH, ATT_D), 1)
    fwd_half = lane_a < LSTM_H
    seq = jnp.concatenate(
        [jnp.where(fwd_half, h_steps[t], h_steps[POOL_T - 1 - t]) for t in range(POOL_T)],
        axis=0)                                           # [B*T, A] = [8, 32], t-major

    # ---- single-head self-attention; batches isolated by a score mask ----
    qkv = jnp.dot(seq, wqkv_ref[...], preferred_element_type=f32) + bqkv_ref[...]   # [8, 3A]
    q = qkv[:, 0:ATT_D]
    k_ = qkv[:, ATT_D:2 * ATT_D]
    v = qkv[:, 2 * ATT_D:3 * ATT_D]
    s_mat = lax.dot_general(q, k_, (((1,), (1,)), ((), ())),
                            preferred_element_type=f32) * (1.0 / math.sqrt(ATT_D))  # [8, 8]
    r_par = lax.broadcasted_iota(jnp.int32, (BT, BT), 0) % BATCH
    c_par = lax.broadcasted_iota(jnp.int32, (BT, BT), 1) % BATCH
    s_mat = jnp.where(r_par == c_par, s_mat, -1e30)       # cross-batch entries -> exp == 0
    s_mat = s_mat - jnp.max(s_mat, axis=-1, keepdims=True)
    p = jnp.exp(s_mat)
    p = p * pl.reciprocal(jnp.sum(p, axis=-1, keepdims=True), approx=True)
    att = jnp.dot(p, v, preferred_element_type=f32)       # [8, A], t-major

    # ---- out_proj + flatten + fc1 folded into per-time-step matmuls ----
    h1 = jnp.zeros((BATCH, HIDDEN), f32) + fc1b_ref[...]
    for t in range(POOL_T):
        h1 = h1 + jnp.dot(att[t * BATCH:(t + 1) * BATCH, :], fc1w_ref[t],
                          preferred_element_type=f32)
    h1 = jnp.maximum(h1, 0.0)
    # TODO(synk): nn.Dropout(0.25) is inference-mode identity; no RNG applied.
    out_ref[...] = (jnp.dot(h1, fc2w_ref[...], preferred_element_type=f32)
                    + fc2b_ref[...])


# ------------------------- wrapper-side algebraic folds ------------------------
def fold_params(p):
    """Offline folds so the kernel sees minimal, MXU-friendly weights."""
    f32 = jnp.float32
    # embedding folded into each conv tap: Wk[k*V + id, c] = emb[id] @ conv_w[:, :, k].T
    wk = jnp.concatenate([p["embedding"] @ p["conv_w_kec"][k] for k in range(KSIZE)],
                         axis=0)                                   # [K*V, C]
    w2 = jnp.kron(jnp.eye(POOL, dtype=f32), wk)                    # [P*K*V, P*C] = [256, 64]
    conv_b2 = jnp.tile(p["conv_b"], (1, POOL))                     # [1, P*C]

    # merged bi-LSTM weights; lane layout per gate block g in (i,f,g,o): [fwd H | rev H]
    H = LSTM_H

    def interleave(wf, wr):
        return jnp.concatenate(
            [jnp.concatenate([wf[:, g * H:(g + 1) * H], wr[:, g * H:(g + 1) * H]], axis=1)
             for g in range(4)], axis=1)

    w_ih_cat = interleave(p["w_ih_f"], p["w_ih_r"])                # [C, 8H]
    b_cat = interleave(p["b_f"], p["b_r"])                         # [1, 8H]
    zeros_h = jnp.zeros((H, 4 * H), f32)
    w_hh_m = interleave(jnp.concatenate([p["w_hh_f"], zeros_h], axis=0),
                        jnp.concatenate([zeros_h, p["w_hh_r"]], axis=0))   # [2H, 8H] block-diag

    # attention out_proj + flatten + fc1 folded: h1 += att_t @ (w_o @ fc1_w[t*A:(t+1)*A])
    fc1w_fold = jnp.stack([p["w_o"] @ p["fc1_w"][t * ATT_D:(t + 1) * ATT_D, :]
                           for t in range(POOL_T)], axis=0)        # [T, A, HIDDEN]
    fc1b_fold = p["fc1_b"] + p["b_o"] @ p["fc1_w"].reshape(POOL_T, ATT_D, HIDDEN).sum(axis=0)

    return {"w2": w2, "conv_b2": conv_b2, "w_ih_cat": w_ih_cat, "b_cat": b_cat,
            "w_hh_m": w_hh_m, "w_qkv": p["w_qkv"], "b_qkv": p["b_qkv"],
            "fc1w_fold": fc1w_fold, "fc1b_fold": fc1b_fold,
            "fc2_w": p["fc2_w"], "fc2_b": p["fc2_b"]}


def make_window_indices(src):
    """[B, L] int ids -> [T*B, P*K] im2col one-hot column indices (t-major rows)."""
    src = src.astype(jnp.int32)
    t_idx = jnp.arange(POOL_T)
    p_idx = jnp.arange(POOL)
    k_idx = jnp.arange(KSIZE)
    pos = (POOL * t_idx[:, None, None] + p_idx[None, :, None]
           + k_idx[None, None, :] - 1)                             # conv pad=1: j + k - 1
    valid = (pos >= 0) & (pos < MAX_LEN)
    ids = src[:, jnp.clip(pos, 0, MAX_LEN - 1)]                    # [B, T, P, K]
    col = (p_idx[None, None, :, None] * (KSIZE * VOCAB)
           + k_idx[None, None, None, :] * VOCAB + ids)
    col = jnp.where(valid[None], col, -1)                          # -1 -> all-zero one-hot row
    return jnp.transpose(col, (1, 0, 2, 3)).reshape(POOL_T * BATCH,
                                                    POOL * KSIZE).astype(jnp.int32)


def neurlux_forward(src, kparams):
    win = make_window_indices(src)
    args = (win, kparams["w2"], kparams["conv_b2"], kparams["w_ih_cat"], kparams["b_cat"],
            kparams["w_hh_m"], kparams["w_qkv"], kparams["b_qkv"],
            kparams["fc1w_fold"], kparams["fc1b_fold"], kparams["fc2_w"], kparams["fc2_b"])
    return pl.pallas_call(
        neurlux_kernel,
        out_shape=jax.ShapeDtypeStruct((BATCH, OUTPUT_DIM), jnp.float32),
    )(*args)


# ----------------------------- parameter init ---------------------------------
def init_params(key):
    def nrm(k, shape, scale=0.1):
        return (scale * jax.random.normal(k, shape)).astype(jnp.float32)

    ks = jax.random.split(key, 16)
    p = {}
    p["embedding"] = nrm(ks[0], (VOCAB, EMBED_DIM), 1.0)
    # Conv1d weight: PyTorch layout [C_out, C_in, K]; folded form uses [K, C_in, C_out].
    conv_w = nrm(ks[1], (CONV_CH, EMBED_DIM, KSIZE))
    p["conv_w_oik"] = conv_w
    p["conv_w_kec"] = jnp.transpose(conv_w, (2, 1, 0))
    p["conv_b"] = nrm(ks[2], (1, CONV_CH))
    # LSTM: weights pre-transposed to [in, 4H]; gate order i,f,g,o; b = b_ih + b_hh.
    p["w_ih_f"] = nrm(ks[3], (CONV_CH, 4 * LSTM_H))
    p["w_hh_f"] = nrm(ks[4], (LSTM_H, 4 * LSTM_H))
    p["b_f"] = nrm(ks[5], (1, 4 * LSTM_H))
    p["w_ih_r"] = nrm(ks[6], (CONV_CH, 4 * LSTM_H))
    p["w_hh_r"] = nrm(ks[7], (LSTM_H, 4 * LSTM_H))
    p["b_r"] = nrm(ks[8], (1, 4 * LSTM_H))
    # MultiheadAttention (num_heads=1): fused in_proj [A, 3A] (pre-transposed).
    p["w_qkv"] = nrm(ks[9], (ATT_D, 3 * ATT_D))
    p["b_qkv"] = nrm(ks[10], (1, 3 * ATT_D))
    p["w_o"] = nrm(ks[11], (ATT_D, ATT_D))
    p["b_o"] = nrm(ks[12], (1, ATT_D))
    # Decoder: fc1 (128 -> 32), fc2 (32 -> 1).
    p["fc1_w"] = nrm(ks[13], (ATT_OUT, HIDDEN))
    p["fc1_b"] = nrm(ks[14], (1, HIDDEN))
    p["fc2_w"] = nrm(ks[15], (HIDDEN, OUTPUT_DIM))
    p["fc2_b"] = jnp.zeros((1, OUTPUT_DIM), jnp.float32)
    return p


# ------------------------------ pure-JAX reference -----------------------------
def reference_forward(src, params):
    """Mirrors NeurLuxModel.forward (eval mode) with plain XLA ops."""
    x = params["embedding"][src]                              # [B, L, E]
    x = jnp.transpose(x, (0, 2, 1))                           # [B, E, L]
    y = lax.conv_general_dilated(x, params["conv_w_oik"], (1,), [(1, 1)],
                                 dimension_numbers=("NCH", "OIH", "NCH"))
    y = y + params["conv_b"].reshape(1, CONV_CH, 1)
    y = jnp.maximum(y, 0.0)                                   # [B, C, L-1]
    y = y[:, :, :POOL_T * POOL].reshape(BATCH, CONV_CH, POOL_T, POOL).max(axis=-1)
    x = jnp.transpose(y, (0, 2, 1))                           # [B, T, C]

    def lstm_dir(xs, w_ih, w_hh, bias, reverse):
        h = jnp.zeros((BATCH, LSTM_H), jnp.float32)
        c = jnp.zeros((BATCH, LSTM_H), jnp.float32)
        outs = [None] * POOL_T
        order = range(POOL_T - 1, -1, -1) if reverse else range(POOL_T)
        for t in order:
            g = xs[:, t, :] @ w_ih + h @ w_hh + bias
            i_g = jax.nn.sigmoid(g[:, 0:LSTM_H])
            f_g = jax.nn.sigmoid(g[:, LSTM_H:2 * LSTM_H])
            c_g = jnp.tanh(g[:, 2 * LSTM_H:3 * LSTM_H])
            o_g = jax.nn.sigmoid(g[:, 3 * LSTM_H:4 * LSTM_H])
            c = f_g * c + i_g * c_g
            h = o_g * jnp.tanh(c)
            outs[t] = h
        return jnp.stack(outs, axis=1)                        # [B, T, H]

    hf = lstm_dir(x, params["w_ih_f"], params["w_hh_f"], params["b_f"], False)
    hr = lstm_dir(x, params["w_ih_r"], params["w_hh_r"], params["b_r"], True)
    x = jnp.concatenate([hf, hr], axis=-1)                    # [B, T, 2H]

    qkv = x @ params["w_qkv"] + params["b_qkv"]               # [B, T, 3A]
    q, k, v = qkv[..., :ATT_D], qkv[..., ATT_D:2 * ATT_D], qkv[..., 2 * ATT_D:]
    s = jnp.einsum("btd,bsd->bts", q, k) / math.sqrt(ATT_D)
    pr = jax.nn.softmax(s, axis=-1)
    o = jnp.einsum("bts,bsd->btd", pr, v)
    o = o @ params["w_o"] + params["b_o"]                     # [B, T, A]
    flat = o.reshape(BATCH, -1)                               # [B, T*A]
    h1 = jnp.maximum(flat @ params["fc1_w"] + params["fc1_b"], 0.0)
    return h1 @ params["fc2_w"] + params["fc2_b"]


# ------------------------------------ main -------------------------------------
if __name__ == "__main__":
    key = jax.random.PRNGKey(0)
    pkey, skey = jax.random.split(key)
    params = init_params(pkey)
    kparams = fold_params(params)
    src = jax.random.randint(skey, (BATCH, MAX_LEN), 0, VOCAB, dtype=jnp.int32)

    out = jax.block_until_ready(neurlux_forward(src, kparams))
    ref = jax.block_until_ready(reference_forward(src, params))

    assert out.shape == (BATCH, OUTPUT_DIM), out.shape
    np.testing.assert_allclose(np.asarray(out), np.asarray(ref), rtol=2e-3, atol=2e-3)

    print("KERNEL_OK")
</pallas_src>

<mosaic_0001>
module attributes {stable_mosaic.version = 11 : i64} {
  func.func @neurlux_kernel(%arg0: memref<8x16xi32, #tpu.memory_space<vmem>>, %arg1: memref<256x64xf32, #tpu.memory_space<vmem>>, %arg2: memref<1x64xf32, #tpu.memory_space<vmem>>, %arg3: memref<16x128xf32, #tpu.memory_space<vmem>>, %arg4: memref<1x128xf32, #tpu.memory_space<vmem>>, %arg5: memref<32x128xf32, #tpu.memory_space<vmem>>, %arg6: memref<32x96xf32, #tpu.memory_space<vmem>>, %arg7: memref<1x96xf32, #tpu.memory_space<vmem>>, %arg8: memref<4x32x32xf32, #tpu.memory_space<vmem>>, %arg9: memref<1x32xf32, #tpu.memory_space<vmem>>, %arg10: memref<32x1xf32, #tpu.memory_space<vmem>>, %arg11: memref<1x1xf32, #tpu.memory_space<vmem>>, %arg12: memref<2x1xf32, #tpu.memory_space<vmem>>) attributes {dimension_semantics = [], scalar_prefetch = 0 : i64, scratch_operands = 0 : i64, tpu.core_type = #tpu.core_type<tc>} {
    %0 = tpu.iota {dimensions = array<i32: 1>} : vector<8x256xi32>
    %c0 = arith.constant 0 : index
    %c0_0 = arith.constant 0 : index
    %1 = vector.load %arg0[%c0, %c0_0] : memref<8x16xi32, #tpu.memory_space<vmem>>, vector<8x1xi32>
    %2 = vector.broadcast %1 : vector<8x1xi32> to vector<8x256xi32>
    %3 = arith.cmpi eq, %0, %2 : vector<8x256xi32>
    %c0_1 = arith.constant 0 : index
    %c1 = arith.constant 1 : index
    %4 = vector.load %arg0[%c0_1, %c1] : memref<8x16xi32, #tpu.memory_space<vmem>>, vector<8x1xi32>
    %5 = vector.broadcast %4 : vector<8x1xi32> to vector<8x256xi32>
    %6 = arith.cmpi eq, %0, %5 : vector<8x256xi32>
    %7 = arith.ori %3, %6 : vector<8x256xi1>
    %c0_2 = arith.constant 0 : index
    %c2 = arith.constant 2 : index
    %8 = vector.load %arg0[%c0_2, %c2] : memref<8x16xi32, #tpu.memory_space<vmem>>, vector<8x1xi32>
    %9 = vector.broadcast %8 : vector<8x1xi32> to vector<8x256xi32>
    %10 = arith.cmpi eq, %0, %9 : vector<8x256xi32>
    %11 = arith.ori %7, %10 : vector<8x256xi1>
    %c0_3 = arith.constant 0 : index
    %c3 = arith.constant 3 : index
    %12 = vector.load %arg0[%c0_3, %c3] : memref<8x16xi32, #tpu.memory_space<vmem>>, vector<8x1xi32>
    %13 = vector.broadcast %12 : vector<8x1xi32> to vector<8x256xi32>
    %14 = arith.cmpi eq, %0, %13 : vector<8x256xi32>
    %15 = arith.ori %11, %14 : vector<8x256xi1>
    %c0_4 = arith.constant 0 : index
    %c4 = arith.constant 4 : index
    %16 = vector.load %arg0[%c0_4, %c4] : memref<8x16xi32, #tpu.memory_space<vmem>>, vector<8x1xi32>
    %17 = vector.broadcast %16 : vector<8x1xi32> to vector<8x256xi32>
    %18 = arith.cmpi eq, %0, %17 : vector<8x256xi32>
    %19 = arith.ori %15, %18 : vector<8x256xi1>
    %c0_5 = arith.constant 0 : index
    %c5 = arith.constant 5 : index
    %20 = vector.load %arg0[%c0_5, %c5] : memref<8x16xi32, #tpu.memory_space<vmem>>, vector<8x1xi32>
    %21 = vector.broadcast %20 : vector<8x1xi32> to vector<8x256xi32>
    %22 = arith.cmpi eq, %0, %21 : vector<8x256xi32>
    %23 = arith.ori %19, %22 : vector<8x256xi1>
    %c0_6 = arith.constant 0 : index
    %c6 = arith.constant 6 : index
    %24 = vector.load %arg0[%c0_6, %c6] : memref<8x16xi32, #tpu.memory_space<vmem>>, vector<8x1xi32>
    %25 = vector.broadcast %24 : vector<8x1xi32> to vector<8x256xi32>
    %26 = arith.cmpi eq, %0, %25 : vector<8x256xi32>
    %27 = arith.ori %23, %26 : vector<8x256xi1>
    %c0_7 = arith.constant 0 : index
    %c7 = arith.constant 7 : index
    %28 = vector.load %arg0[%c0_7, %c7] : memref<8x16xi32, #tpu.memory_space<vmem>>, vector<8x1xi32>
    %29 = vector.broadcast %28 : vector<8x1xi32> to vector<8x256xi32>
    %30 = arith.cmpi eq, %0, %29 : vector<8x256xi32>
    %31 = arith.ori %27, %30 : vector<8x256xi1>
    %c0_8 = arith.constant 0 : index
    %c8 = arith.constant 8 : index
    %32 = vector.load %arg0[%c0_8, %c8] : memref<8x16xi32, #tpu.memory_space<vmem>>, vector<8x1xi32>
    %33 = vector.broadcast %32 : vector<8x1xi32> to vector<8x256xi32>
    %34 = arith.cmpi eq, %0, %33 : vector<8x256xi32>
    %35 = arith.ori %31, %34 : vector<8x256xi1>
    %c0_9 = arith.constant 0 : index
    %c9 = arith.constant 9 : index
    %36 = vector.load %arg0[%c0_9, %c9] : memref<8x16xi32, #tpu.memory_space<vmem>>, vector<8x1xi32>
    %37 = vector.broadcast %36 : vector<8x1xi32> to vector<8x256xi32>
    %38 = arith.cmpi eq, %0, %37 : vector<8x256xi32>
    %39 = arith.ori %35, %38 : vector<8x256xi1>
    %c0_10 = arith.constant 0 : index
    %c10 = arith.constant 10 : index
    %40 = vector.load %arg0[%c0_10, %c10] : memref<8x16xi32, #tpu.memory_space<vmem>>, vector<8x1xi32>
    %41 = vector.broadcast %40 : vector<8x1xi32> to vector<8x256xi32>
    %42 = arith.cmpi eq, %0, %41 : vector<8x256xi32>
    %43 = arith.ori %39, %42 : vector<8x256xi1>
    %c0_11 = arith.constant 0 : index
    %c11 = arith.constant 11 : index
    %44 = vector.load %arg0[%c0_11, %c11] : memref<8x16xi32, #tpu.memory_space<vmem>>, vector<8x1xi32>
    %45 = vector.broadcast %44 : vector<8x1xi32> to vector<8x256xi32>
    %46 = arith.cmpi eq, %0, %45 : vector<8x256xi32>
    %47 = arith.ori %43, %46 : vector<8x256xi1>
    %c0_12 = arith.constant 0 : index
    %c12 = arith.constant 12 : index
    %48 = vector.load %arg0[%c0_12, %c12] : memref<8x16xi32, #tpu.memory_space<vmem>>, vector<8x1xi32>
    %49 = vector.broadcast %48 : vector<8x1xi32> to vector<8x256xi32>
    %50 = arith.cmpi eq, %0, %49 : vector<8x256xi32>
    %51 = arith.ori %47, %50 : vector<8x256xi1>
    %c0_13 = arith.constant 0 : index
    %c13 = arith.constant 13 : index
    %52 = vector.load %arg0[%c0_13, %c13] : memref<8x16xi32, #tpu.memory_space<vmem>>, vector<8x1xi32>
    %53 = vector.broadcast %52 : vector<8x1xi32> to vector<8x256xi32>
    %54 = arith.cmpi eq, %0, %53 : vector<8x256xi32>
    %55 = arith.ori %51, %54 : vector<8x256xi1>
    %c0_14 = arith.constant 0 : index
    %c14 = arith.constant 14 : index
    %56 = vector.load %arg0[%c0_14, %c14] : memref<8x16xi32, #tpu.memory_space<vmem>>, vector<8x1xi32>
    %57 = vector.broadcast %56 : vector<8x1xi32> to vector<8x256xi32>
    %58 = arith.cmpi eq, %0, %57 : vector<8x256xi32>
    %59 = arith.ori %55, %58 : vector<8x256xi1>
    %c0_15 = arith.constant 0 : index
    %c15 = arith.constant 15 : index
    %60 = vector.load %arg0[%c0_15, %c15] : memref<8x16xi32, #tpu.memory_space<vmem>>, vector<8x1xi32>
    %61 = vector.broadcast %60 : vector<8x1xi32> to vector<8x256xi32>
    %62 = arith.cmpi eq, %0, %61 : vector<8x256xi32>
    %63 = arith.ori %59, %62 : vector<8x256xi1>
    %64 = arith.extui %63 : vector<8x256xi1> to vector<8x256xi32>
    %65 = arith.sitofp %64 : vector<8x256xi32> to vector<8x256xf32>
    %c0_16 = arith.constant 0 : index
    %c0_17 = arith.constant 0 : index
    %66 = vector.load %arg1[%c0_16, %c0_17] : memref<256x64xf32, #tpu.memory_space<vmem>>, vector<256x64xf32>
    %cst = arith.constant dense<0.000000e+00> : vector<8x64xf32>
    %67 = tpu.matmul %65, %66, %cst {dimension_numbers = #tpu.dot_dimension_numbers<[1], [0], [0], [1], [0, 0, 1, 1], [], []>} : vector<8x256xf32>, vector<256x64xf32>, vector<8x64xf32> -> vector<8x64xf32>
    %c0_18 = arith.constant 0 : index
    %c0_19 = arith.constant 0 : index
    %68 = vector.load %arg2[%c0_18, %c0_19] : memref<1x64xf32, #tpu.memory_space<vmem>>, vector<1x64xf32>
    %69 = vector.broadcast %68 : vector<1x64xf32> to vector<8x64xf32>
    %70 = arith.addf %67, %69 : vector<8x64xf32>
    %cst_20 = arith.constant 0.000000e+00 : f32
    %71 = vector.broadcast %cst_20 : f32 to vector<8x64xf32>
    %72 = arith.maximumf %70, %71 : vector<8x64xf32>
    %73 = vector.extract_strided_slice %72 {offsets = [0, 0], sizes = [8, 16], strides = [1, 1]} : vector<8x64xf32> to vector<8x16xf32>
    %74 = vector.extract_strided_slice %72 {offsets = [0, 16], sizes = [8, 16], strides = [1, 1]} : vector<8x64xf32> to vector<8x16xf32>
    %75 = arith.maximumf %73, %74 : vector<8x16xf32>
    %76 = vector.extract_strided_slice %72 {offsets = [0, 32], sizes = [8, 16], strides = [1, 1]} : vector<8x64xf32> to vector<8x16xf32>
    %77 = vector.extract_strided_slice %72 {offsets = [0, 48], sizes = [8, 16], strides = [1, 1]} : vector<8x64xf32> to vector<8x16xf32>
    %78 = arith.maximumf %76, %77 : vector<8x16xf32>
    %79 = arith.maximumf %75, %78 : vector<8x16xf32>
    %c0_21 = arith.constant 0 : index
    %c0_22 = arith.constant 0 : index
    %80 = vector.load %arg3[%c0_21, %c0_22] : memref<16x128xf32, #tpu.memory_space<vmem>>, vector<16x128xf32>
    %cst_23 = arith.constant dense<0.000000e+00> : vector<8x128xf32>
    %81 = tpu.matmul %79, %80, %cst_23 {dimension_numbers = #tpu.dot_dimension_numbers<[1], [0], [0], [1], [0, 0, 1, 1], [], []>} : vector<8x16xf32>, vector<16x128xf32>, vector<8x128xf32> -> vector<8x128xf32>
    %c0_24 = arith.constant 0 : index
    %c0_25 = arith.constant 0 : index
    %82 = vector.load %arg4[%c0_24, %c0_25] : memref<1x128xf32, #tpu.memory_space<vmem>>, vector<1x128xf32>
    %83 = vector.broadcast %82 : vector<1x128xf32> to vector<8x128xf32>
    %84 = arith.addf %81, %83 : vector<8x128xf32>
    %c0_26 = arith.constant 0 : index
    %c0_27 = arith.constant 0 : index
    %85 = vector.load %arg5[%c0_26, %c0_27] : memref<32x128xf32, #tpu.memory_space<vmem>>, vector<32x128xf32>
    %86 = tpu.iota {dimensions = array<i32: 1>} : vector<2x128xi32>
    %c32_i32 = arith.constant 32 : i32
    %c0_i32 = arith.constant 0 : i32
    %87 = arith.cmpi eq, %c32_i32, %c0_i32 : i32
    %c1_i32 = arith.constant 1 : i32
    %88 = arith.select %87, %c1_i32, %c32_i32 : i32
    %89 = vector.broadcast %88 : i32 to vector<2x128xi32>
    %90 = arith.remsi %86, %89 : vector<2x128xi32>
    %c0_i32_28 = arith.constant 0 : i32
    %91 = vector.broadcast %c0_i32_28 : i32 to vector<2x128xi32>
    %92 = arith.cmpi ne, %90, %91 : vector<2x128xi32>
    %c0_i32_29 = arith.constant 0 : i32
    %93 = vector.broadcast %c0_i32_29 : i32 to vector<2x128xi32>
    %94 = arith.cmpi slt, %90, %93 : vector<2x128xi32>
    %c0_i32_30 = arith.constant 0 : i32
    %95 = arith.cmpi slt, %88, %c0_i32_30 : i32
    %96 = vector.broadcast %95 : i1 to vector<2x128xi1>
    %97 = vector.broadcast %96 : vector<2x128xi1> to vector<2x128xi1>
    %98 = arith.xori %94, %97 : vector<2x128xi1>
    %99 = arith.andi %98, %92 : vector<2x128xi1>
    %100 = vector.broadcast %88 : i32 to vector<2x128xi32>
    %101 = arith.addi %90, %100 : vector<2x128xi32>
    %102 = arith.select %99, %101, %90 : vector<2x128xi1>, vector<2x128xi32>
    %c16_i32 = arith.constant 16 : i32
    %103 = vector.broadcast %c16_i32 : i32 to vector<2x128xi32>
    %104 = arith.cmpi slt, %102, %103 : vector<2x128xi32>
    %c64_i32 = arith.constant 64 : i32
    %105 = vector.broadcast %c64_i32 : i32 to vector<2x128xi32>
    %106 = arith.cmpi sge, %86, %105 : vector<2x128xi32>
    %c96_i32 = arith.constant 96 : i32
    %107 = vector.broadcast %c96_i32 : i32 to vector<2x128xi32>
    %108 = arith.cmpi slt, %86, %107 : vector<2x128xi32>
    %109 = arith.andi %106, %108 : vector<2x128xi1>
    %cst_31 = arith.constant 0.000000e+00 : f32
    %110 = vector.broadcast %cst_31 : f32 to vector<2x32xf32>
    %cst_32 = arith.constant 0.000000e+00 : f32
    %111 = vector.broadcast %cst_32 : f32 to vector<2x32xf32>
    %112 = vector.extract_strided_slice %84 {offsets = [0, 0], sizes = [2, 128], strides = [1, 1]} : vector<8x128xf32> to vector<2x128xf32>
    %113 = vector.extract_strided_slice %84 {offsets = [6, 0], sizes = [2, 128], strides = [1, 1]} : vector<8x128xf32> to vector<2x128xf32>
    %114 = arith.select %104, %112, %113 : vector<2x128xi1>, vector<2x128xf32>
    %cst_33 = arith.constant dense<0.000000e+00> : vector<2x128xf32>
    %115 = tpu.matmul %110, %85, %cst_33 {dimension_numbers = #tpu.dot_dimension_numbers<[1], [0], [0], [1], [0, 0, 1, 1], [], []>} : vector<2x32xf32>, vector<32x128xf32>, vector<2x128xf32> -> vector<2x128xf32>
    %116 = arith.addf %114, %115 : vector<2x128xf32>
    %117 = math.tanh %116 : vector<2x128xf32>
    %cst_34 = arith.constant 5.000000e-01 : f32
    %118 = vector.broadcast %cst_34 : f32 to vector<2x128xf32>
    %119 = arith.mulf %118, %116 : vector<2x128xf32>
    %120 = math.tanh %119 : vector<2x128xf32>
    %cst_35 = arith.constant 1.000000e+00 : f32
    %121 = vector.broadcast %cst_35 : f32 to vector<2x128xf32>
    %122 = arith.addf %120, %121 : vector<2x128xf32>
    %cst_36 = arith.constant 5.000000e-01 : f32
    %123 = vector.broadcast %cst_36 : f32 to vector<2x128xf32>
    %124 = arith.mulf %123, %122 : vector<2x128xf32>
    %125 = arith.select %109, %117, %124 : vector<2x128xi1>, vector<2x128xf32>
    %126 = vector.extract_strided_slice %125 {offsets = [0, 0], sizes = [2, 32], strides = [1, 1]} : vector<2x128xf32> to vector<2x32xf32>
    %127 = vector.extract_strided_slice %125 {offsets = [0, 32], sizes = [2, 32], strides = [1, 1]} : vector<2x128xf32> to vector<2x32xf32>
    %128 = vector.extract_strided_slice %125 {offsets = [0, 64], sizes = [2, 32], strides = [1, 1]} : vector<2x128xf32> to vector<2x32xf32>
    %129 = vector.extract_strided_slice %125 {offsets = [0, 96], sizes = [2, 32], strides = [1, 1]} : vector<2x128xf32> to vector<2x32xf32>
    %130 = arith.mulf %127, %111 : vector<2x32xf32>
    %131 = arith.mulf %126, %128 : vector<2x32xf32>
    %132 = arith.addf %130, %131 : vector<2x32xf32>
    %133 = math.tanh %132 : vector<2x32xf32>
    %134 = arith.mulf %129, %133 : vector<2x32xf32>
    %135 = vector.extract_strided_slice %84 {offsets = [2, 0], sizes = [2, 128], strides = [1, 1]} : vector<8x128xf32> to vector<2x128xf32>
    %136 = vector.extract_strided_slice %84 {offsets = [4, 0], sizes = [2, 128], strides = [1, 1]} : vector<8x128xf32> to vector<2x128xf32>
    %137 = arith.select %104, %135, %136 : vector<2x128xi1>, vector<2x128xf32>
    %cst_37 = arith.constant dense<0.000000e+00> : vector<2x128xf32>
    %138 = tpu.matmul %134, %85, %cst_37 {dimension_numbers = #tpu.dot_dimension_numbers<[1], [0], [0], [1], [0, 0, 1, 1], [], []>} : vector<2x32xf32>, vector<32x128xf32>, vector<2x128xf32> -> vector<2x128xf32>
    %139 = arith.addf %137, %138 : vector<2x128xf32>
    %140 = math.tanh %139 : vector<2x128xf32>
    %cst_38 = arith.constant 5.000000e-01 : f32
    %141 = vector.broadcast %cst_38 : f32 to vector<2x128xf32>
    %142 = arith.mulf %141, %139 : vector<2x128xf32>
    %143 = math.tanh %142 : vector<2x128xf32>
    %cst_39 = arith.constant 1.000000e+00 : f32
    %144 = vector.broadcast %cst_39 : f32 to vector<2x128xf32>
    %145 = arith.addf %143, %144 : vector<2x128xf32>
    %cst_40 = arith.constant 5.000000e-01 : f32
    %146 = vector.broadcast %cst_40 : f32 to vector<2x128xf32>
    %147 = arith.mulf %146, %145 : vector<2x128xf32>
    %148 = arith.select %109, %140, %147 : vector<2x128xi1>, vector<2x128xf32>
    %149 = vector.extract_strided_slice %148 {offsets = [0, 0], sizes = [2, 32], strides = [1, 1]} : vector<2x128xf32> to vector<2x32xf32>
    %150 = vector.extract_strided_slice %148 {offsets = [0, 32], sizes = [2, 32], strides = [1, 1]} : vector<2x128xf32> to vector<2x32xf32>
    %151 = vector.extract_strided_slice %148 {offsets = [0, 64], sizes = [2, 32], strides = [1, 1]} : vector<2x128xf32> to vector<2x32xf32>
    %152 = vector.extract_strided_slice %148 {offsets = [0, 96], sizes = [2, 32], strides = [1, 1]} : vector<2x128xf32> to vector<2x32xf32>
    %153 = arith.mulf %150, %132 : vector<2x32xf32>
    %154 = arith.mulf %149, %151 : vector<2x32xf32>
    %155 = arith.addf %153, %154 : vector<2x32xf32>
    %156 = math.tanh %155 : vector<2x32xf32>
    %157 = arith.mulf %152, %156 : vector<2x32xf32>
    %158 = vector.extract_strided_slice %84 {offsets = [4, 0], sizes = [2, 128], strides = [1, 1]} : vector<8x128xf32> to vector<2x128xf32>
    %159 = vector.extract_strided_slice %84 {offsets = [2, 0], sizes = [2, 128], strides = [1, 1]} : vector<8x128xf32> to vector<2x128xf32>
    %160 = arith.select %104, %158, %159 : vector<2x128xi1>, vector<2x128xf32>
    %cst_41 = arith.constant dense<0.000000e+00> : vector<2x128xf32>
    %161 = tpu.matmul %157, %85, %cst_41 {dimension_numbers = #tpu.dot_dimension_numbers<[1], [0], [0], [1], [0, 0, 1, 1], [], []>} : vector<2x32xf32>, vector<32x128xf32>, vector<2x128xf32> -> vector<2x128xf32>
    %162 = arith.addf %160, %161 : vector<2x128xf32>
    %163 = math.tanh %162 : vector<2x128xf32>
    %cst_42 = arith.constant 5.000000e-01 : f32
    %164 = vector.broadcast %cst_42 : f32 to vector<2x128xf32>
    %165 = arith.mulf %164, %162 : vector<2x128xf32>
    %166 = math.tanh %165 : vector<2x128xf32>
    %cst_43 = arith.constant 1.000000e+00 : f32
    %167 = vector.broadcast %cst_43 : f32 to vector<2x128xf32>
    %168 = arith.addf %166, %167 : vector<2x128xf32>
    %cst_44 = arith.constant 5.000000e-01 : f32
    %169 = vector.broadcast %cst_44 : f32 to vector<2x128xf32>
    %170 = arith.mulf %169, %168 : vector<2x128xf32>
    %171 = arith.select %109, %163, %170 : vector<2x128xi1>, vector<2x128xf32>
    %172 = vector.extract_strided_slice %171 {offsets = [0, 0], sizes = [2, 32], strides = [1, 1]} : vector<2x128xf32> to vector<2x32xf32>
    %173 = vector.extract_strided_slice %171 {offsets = [0, 32], sizes = [2, 32], strides = [1, 1]} : vector<2x128xf32> to vector<2x32xf32>
    %174 = vector.extract_strided_slice %171 {offsets = [0, 64], sizes = [2, 32], strides = [1, 1]} : vector<2x128xf32> to vector<2x32xf32>
    %175 = vector.extract_strided_slice %171 {offsets = [0, 96], sizes = [2, 32], strides = [1, 1]} : vector<2x128xf32> to vector<2x32xf32>
    %176 = arith.mulf %173, %155 : vector<2x32xf32>
    %177 = arith.mulf %172, %174 : vector<2x32xf32>
    %178 = arith.addf %176, %177 : vector<2x32xf32>
    %179 = math.tanh %178 : vector<2x32xf32>
    %180 = arith.mulf %175, %179 : vector<2x32xf32>
    %181 = vector.extract_strided_slice %84 {offsets = [6, 0], sizes = [2, 128], strides = [1, 1]} : vector<8x128xf32> to vector<2x128xf32>
    %182 = vector.extract_strided_slice %84 {offsets = [0, 0], sizes = [2, 128], strides = [1, 1]} : vector<8x128xf32> to vector<2x128xf32>
    %183 = arith.select %104, %181, %182 : vector<2x128xi1>, vector<2x128xf32>
    %cst_45 = arith.constant dense<0.000000e+00> : vector<2x128xf32>
    %184 = tpu.matmul %180, %85, %cst_45 {dimension_numbers = #tpu.dot_dimension_numbers<[1], [0], [0], [1], [0, 0, 1, 1], [], []>} : vector<2x32xf32>, vector<32x128xf32>, vector<2x128xf32> -> vector<2x128xf32>
    %185 = arith.addf %183, %184 : vector<2x128xf32>
    %186 = math.tanh %185 : vector<2x128xf32>
    %cst_46 = arith.constant 5.000000e-01 : f32
    %187 = vector.broadcast %cst_46 : f32 to vector<2x128xf32>
    %188 = arith.mulf %187, %185 : vector<2x128xf32>
    %189 = math.tanh %188 : vector<2x128xf32>
    %cst_47 = arith.constant 1.000000e+00 : f32
    %190 = vector.broadcast %cst_47 : f32 to vector<2x128xf32>
    %191 = arith.addf %189, %190 : vector<2x128xf32>
    %cst_48 = arith.constant 5.000000e-01 : f32
    %192 = vector.broadcast %cst_48 : f32 to vector<2x128xf32>
    %193 = arith.mulf %192, %191 : vector<2x128xf32>
    %194 = arith.select %109, %186, %193 : vector<2x128xi1>, vector<2x128xf32>
    %195 = vector.extract_strided_slice %194 {offsets = [0, 0], sizes = [2, 32], strides = [1, 1]} : vector<2x128xf32> to vector<2x32xf32>
    %196 = vector.extract_strided_slice %194 {offsets = [0, 32], sizes = [2, 32], strides = [1, 1]} : vector<2x128xf32> to vector<2x32xf32>
    %197 = vector.extract_strided_slice %194 {offsets = [0, 64], sizes = [2, 32], strides = [1, 1]} : vector<2x128xf32> to vector<2x32xf32>
    %198 = vector.extract_strided_slice %194 {offsets = [0, 96], sizes = [2, 32], strides = [1, 1]} : vector<2x128xf32> to vector<2x32xf32>
    %199 = arith.mulf %196, %178 : vector<2x32xf32>
    %200 = arith.mulf %195, %197 : vector<2x32xf32>
    %201 = arith.addf %199, %200 : vector<2x32xf32>
    %202 = math.tanh %201 : vector<2x32xf32>
    %203 = arith.mulf %198, %202 : vector<2x32xf32>
    %204 = tpu.iota {dimensions = array<i32: 1>} : vector<2x32xi32>
    %c16_i32_49 = arith.constant 16 : i32
    %205 = vector.broadcast %c16_i32_49 : i32 to vector<2x32xi32>
    %206 = arith.cmpi slt, %204, %205 : vector<2x32xi32>
    %207 = arith.select %206, %134, %203 : vector<2x32xi1>, vector<2x32xf32>
    %208 = arith.select %206, %157, %180 : vector<2x32xi1>, vector<2x32xf32>
    %209 = arith.select %206, %180, %157 : vector<2x32xi1>, vector<2x32xf32>
    %210 = arith.select %206, %203, %134 : vector<2x32xi1>, vector<2x32xf32>
    %211 = tpu.concatenate %207, %208, %209, %210 in 0 : vector<2x32xf32>, vector<2x32xf32>, vector<2x32xf32>, vector<2x32xf32> -> vector<8x32xf32>
    %c0_50 = arith.constant 0 : index
    %c0_51 = arith.constant 0 : index
    %212 = vector.load %arg6[%c0_50, %c0_51] : memref<32x96xf32, #tpu.memory_space<vmem>>, vector<32x96xf32>
    %cst_52 = arith.constant dense<0.000000e+00> : vector<8x96xf32>
    %213 = tpu.matmul %211, %212, %cst_52 {dimension_numbers = #tpu.dot_dimension_numbers<[1], [0], [0], [1], [0, 0, 1, 1], [], []>} : vector<8x32xf32>, vector<32x96xf32>, vector<8x96xf32> -> vector<8x96xf32>
    %c0_53 = arith.constant 0 : index
    %c0_54 = arith.constant 0 : index
    %214 = vector.load %arg7[%c0_53, %c0_54] : memref<1x96xf32, #tpu.memory_space<vmem>>, vector<1x96xf32>
    %215 = vector.broadcast %214 : vector<1x96xf32> to vector<8x96xf32>
    %216 = arith.addf %213, %215 : vector<8x96xf32>
    %217 = vector.extract_strided_slice %216 {offsets = [0, 0], sizes = [8, 32], strides = [1, 1]} : vector<8x96xf32> to vector<8x32xf32>
    %218 = vector.extract_strided_slice %216 {offsets = [0, 32], sizes = [8, 32], strides = [1, 1]} : vector<8x96xf32> to vector<8x32xf32>
    %219 = vector.extract_strided_slice %216 {offsets = [0, 64], sizes = [8, 32], strides = [1, 1]} : vector<8x96xf32> to vector<8x32xf32>
    %cst_55 = arith.constant dense<0.000000e+00> : vector<8x8xf32>
    %220 = tpu.matmul %217, %218, %cst_55 {dimension_numbers = #tpu.dot_dimension_numbers<[1], [1], [0], [0], [0, 0, 1, 0], [], []>} : vector<8x32xf32>, vector<8x32xf32>, vector<8x8xf32> -> vector<8x8xf32>
    %cst_56 = arith.constant 0.176776692 : f32
    %221 = vector.broadcast %cst_56 : f32 to vector<8x8xf32>
    %222 = arith.mulf %220, %221 : vector<8x8xf32>
    %223 = tpu.iota {dimensions = array<i32: 0>} : vector<8x8xi32>
    %c2_i32 = arith.constant 2 : i32
    %c0_i32_57 = arith.constant 0 : i32
    %224 = arith.cmpi eq, %c2_i32, %c0_i32_57 : i32
    %c1_i32_58 = arith.constant 1 : i32
    %225 = arith.select %224, %c1_i32_58, %c2_i32 : i32
    %226 = vector.broadcast %225 : i32 to vector<8x8xi32>
    %227 = arith.remsi %223, %226 : vector<8x8xi32>
    %c0_i32_59 = arith.constant 0 : i32
    %228 = vector.broadcast %c0_i32_59 : i32 to vector<8x8xi32>
    %229 = arith.cmpi ne, %227, %228 : vector<8x8xi32>
    %c0_i32_60 = arith.constant 0 : i32
    %230 = vector.broadcast %c0_i32_60 : i32 to vector<8x8xi32>
    %231 = arith.cmpi slt, %227, %230 : vector<8x8xi32>
    %c0_i32_61 = arith.constant 0 : i32
    %232 = arith.cmpi slt, %225, %c0_i32_61 : i32
    %233 = vector.broadcast %232 : i1 to vector<8x8xi1>
    %234 = vector.broadcast %233 : vector<8x8xi1> to vector<8x8xi1>
    %235 = arith.xori %231, %234 : vector<8x8xi1>
    %236 = arith.andi %235, %229 : vector<8x8xi1>
    %237 = vector.broadcast %225 : i32 to vector<8x8xi32>
    %238 = arith.addi %227, %237 : vector<8x8xi32>
    %239 = arith.select %236, %238, %227 : vector<8x8xi1>, vector<8x8xi32>
    %240 = tpu.iota {dimensions = array<i32: 1>} : vector<8x8xi32>
    %c2_i32_62 = arith.constant 2 : i32
    %c0_i32_63 = arith.constant 0 : i32
    %241 = arith.cmpi eq, %c2_i32_62, %c0_i32_63 : i32
    %c1_i32_64 = arith.constant 1 : i32
    %242 = arith.select %241, %c1_i32_64, %c2_i32_62 : i32
    %243 = vector.broadcast %242 : i32 to vector<8x8xi32>
    %244 = arith.remsi %240, %243 : vector<8x8xi32>
    %c0_i32_65 = arith.constant 0 : i32
    %245 = vector.broadcast %c0_i32_65 : i32 to vector<8x8xi32>
    %246 = arith.cmpi ne, %244, %245 : vector<8x8xi32>
    %c0_i32_66 = arith.constant 0 : i32
    %247 = vector.broadcast %c0_i32_66 : i32 to vector<8x8xi32>
    %248 = arith.cmpi slt, %244, %247 : vector<8x8xi32>
    %c0_i32_67 = arith.constant 0 : i32
    %249 = arith.cmpi slt, %242, %c0_i32_67 : i32
    %250 = vector.broadcast %249 : i1 to vector<8x8xi1>
    %251 = vector.broadcast %250 : vector<8x8xi1> to vector<8x8xi1>
    %252 = arith.xori %248, %251 : vector<8x8xi1>
    %253 = arith.andi %252, %246 : vector<8x8xi1>
    %254 = vector.broadcast %242 : i32 to vector<8x8xi32>
    %255 = arith.addi %244, %254 : vector<8x8xi32>
    %256 = arith.select %253, %255, %244 : vector<8x8xi1>, vector<8x8xi32>
    %257 = arith.cmpi eq, %239, %256 : vector<8x8xi32>
    %cst_68 = arith.constant -1.000000e+30 : f32
    %258 = vector.broadcast %cst_68 : f32 to vector<8x8xf32>
    %259 = arith.select %257, %222, %258 : vector<8x8xi1>, vector<8x8xf32>
    %cst_69 = arith.constant dense<0xFF800000> : vector<8xf32>
    %260 = vector.multi_reduction <maximumf>, %259, %cst_69 [1] : vector<8x8xf32> to vector<8xf32>
    %261 = vector.shape_cast %260 : vector<8xf32> to vector<8x1xf32>
    %262 = vector.broadcast %261 : vector<8x1xf32> to vector<8x8xf32>
    %263 = arith.subf %259, %262 : vector<8x8xf32>
    %264 = math.exp %263 : vector<8x8xf32>
    %cst_70 = arith.constant dense<0.000000e+00> : vector<8xf32>
    %265 = vector.multi_reduction <add>, %264, %cst_70 [1] : vector<8x8xf32> to vector<8xf32>
    %266 = vector.shape_cast %265 : vector<8xf32> to vector<8x1xf32>
    %267 = tpu.reciprocal %266 {approx = true} : vector<8x1xf32> -> vector<8x1xf32>
    %268 = vector.broadcast %267 : vector<8x1xf32> to vector<8x8xf32>
    %269 = arith.mulf %264, %268 : vector<8x8xf32>
    %cst_71 = arith.constant dense<0.000000e+00> : vector<8x32xf32>
    %270 = tpu.matmul %269, %219, %cst_71 {dimension_numbers = #tpu.dot_dimension_numbers<[1], [0], [0], [1], [0, 0, 1, 1], [], []>} : vector<8x8xf32>, vector<8x32xf32>, vector<8x32xf32> -> vector<8x32xf32>
    %cst_72 = arith.constant 0.000000e+00 : f32
    %271 = vector.broadcast %cst_72 : f32 to vector<2x32xf32>
    %c0_73 = arith.constant 0 : index
    %c0_74 = arith.constant 0 : index
    %272 = vector.load %arg9[%c0_73, %c0_74] : memref<1x32xf32, #tpu.memory_space<vmem>>, vector<1x32xf32>
    %273 = vector.broadcast %272 : vector<1x32xf32> to vector<2x32xf32>
    %274 = arith.addf %271, %273 : vector<2x32xf32>
    %275 = vector.extract_strided_slice %270 {offsets = [0, 0], sizes = [2, 32], strides = [1, 1]} : vector<8x32xf32> to vector<2x32xf32>
    %c0_75 = arith.constant 0 : index
    %c0_76 = arith.constant 0 : index
    %c0_77 = arith.constant 0 : index
    %276 = vector.load %arg8[%c0_75, %c0_76, %c0_77] : memref<4x32x32xf32, #tpu.memory_space<vmem>>, vector<1x32x32xf32>
    %277 = vector.shape_cast %276 : vector<1x32x32xf32> to vector<32x32xf32>
    %cst_78 = arith.constant dense<0.000000e+00> : vector<2x32xf32>
    %278 = tpu.matmul %275, %277, %cst_78 {dimension_numbers = #tpu.dot_dimension_numbers<[1], [0], [0], [1], [0, 0, 1, 1], [], []>} : vector<2x32xf32>, vector<32x32xf32>, vector<2x32xf32> -> vector<2x32xf32>
    %279 = arith.addf %274, %278 : vector<2x32xf32>
    %280 = vector.extract_strided_slice %270 {offsets = [2, 0], sizes = [2, 32], strides = [1, 1]} : vector<8x32xf32> to vector<2x32xf32>
    %c1_79 = arith.constant 1 : index
    %c0_80 = arith.constant 0 : index
    %c0_81 = arith.constant 0 : index
    %281 = vector.load %arg8[%c1_79, %c0_80, %c0_81] : memref<4x32x32xf32, #tpu.memory_space<vmem>>, vector<1x32x32xf32>
    %282 = vector.shape_cast %281 : vector<1x32x32xf32> to vector<32x32xf32>
    %cst_82 = arith.constant dense<0.000000e+00> : vector<2x32xf32>
    %283 = tpu.matmul %280, %282, %cst_82 {dimension_numbers = #tpu.dot_dimension_numbers<[1], [0], [0], [1], [0, 0, 1, 1], [], []>} : vector<2x32xf32>, vector<32x32xf32>, vector<2x32xf32> -> vector<2x32xf32>
    %284 = arith.addf %279, %283 : vector<2x32xf32>
    %285 = vector.extract_strided_slice %270 {offsets = [4, 0], sizes = [2, 32], strides = [1, 1]} : vector<8x32xf32> to vector<2x32xf32>
    %c2_83 = arith.constant 2 : index
    %c0_84 = arith.constant 0 : index
    %c0_85 = arith.constant 0 : index
    %286 = vector.load %arg8[%c2_83, %c0_84, %c0_85] : memref<4x32x32xf32, #tpu.memory_space<vmem>>, vector<1x32x32xf32>
    %287 = vector.shape_cast %286 : vector<1x32x32xf32> to vector<32x32xf32>
    %cst_86 = arith.constant dense<0.000000e+00> : vector<2x32xf32>
    %288 = tpu.matmul %285, %287, %cst_86 {dimension_numbers = #tpu.dot_dimension_numbers<[1], [0], [0], [1], [0, 0, 1, 1], [], []>} : vector<2x32xf32>, vector<32x32xf32>, vector<2x32xf32> -> vector<2x32xf32>
    %289 = arith.addf %284, %288 : vector<2x32xf32>
    %290 = vector.extract_strided_slice %270 {offsets = [6, 0], sizes = [2, 32], strides = [1, 1]} : vector<8x32xf32> to vector<2x32xf32>
    %c3_87 = arith.constant 3 : index
    %c0_88 = arith.constant 0 : index
    %c0_89 = arith.constant 0 : index
    %291 = vector.load %arg8[%c3_87, %c0_88, %c0_89] : memref<4x32x32xf32, #tpu.memory_space<vmem>>, vector<1x32x32xf32>
    %292 = vector.shape_cast %291 : vector<1x32x32xf32> to vector<32x32xf32>
    %cst_90 = arith.constant dense<0.000000e+00> : vector<2x32xf32>
    %293 = tpu.matmul %290, %292, %cst_90 {dimension_numbers = #tpu.dot_dimension_numbers<[1], [0], [0], [1], [0, 0, 1, 1], [], []>} : vector<2x32xf32>, vector<32x32xf32>, vector<2x32xf32> -> vector<2x32xf32>
    %294 = arith.addf %289, %293 : vector<2x32xf32>
    %cst_91 = arith.constant 0.000000e+00 : f32
    %295 = vector.broadcast %cst_91 : f32 to vector<2x32xf32>
    %296 = arith.maximumf %294, %295 : vector<2x32xf32>
    %c0_92 = arith.constant 0 : index
    %c0_93 = arith.constant 0 : index
    %297 = vector.load %arg10[%c0_92, %c0_93] : memref<32x1xf32, #tpu.memory_space<vmem>>, vector<32x1xf32>
    %cst_94 = arith.constant dense<0.000000e+00> : vector<2x1xf32>
    %298 = tpu.matmul %296, %297, %cst_94 {dimension_numbers = #tpu.dot_dimension_numbers<[1], [0], [0], [1], [0, 0, 1, 1], [], []>} : vector<2x32xf32>, vector<32x1xf32>, vector<2x1xf32> -> vector<2x1xf32>
    %c0_95 = arith.constant 0 : index
    %c0_96 = arith.constant 0 : index
    %299 = vector.load %arg11[%c0_95, %c0_96] : memref<1x1xf32, #tpu.memory_space<vmem>>, vector<1x1xf32>
    %300 = vector.broadcast %299 : vector<1x1xf32> to vector<2x1xf32>
    %301 = arith.addf %298, %300 : vector<2x1xf32>
    %c0_97 = arith.constant 0 : index
    %c0_98 = arith.constant 0 : index
    %302 = vector.load %arg12[%c0_97, %c0_98] : memref<2x1xf32, #tpu.memory_space<vmem>>, vector<2x1xf32>
    tpu.vector_store %arg12[%c0_97, %c0_98], %301 {strides = array<i32>} : memref<2x1xf32, #tpu.memory_space<vmem>>, vector<2x1xf32>,
    return
  }
}

</mosaic_0001>

<llo_original>
// kernel: tpu_custom_call.1
$region0: #{tpu_custom_call.1}
  #allocation0 [shape = 'u32[]', space=smem, size = 0x4, offset = 0x4, fixed_abs, tag = 'smem constant byte address 0x4 - core index']
  #allocation1 [shape = 'u32[144,128]{1,0:T(1,128)}', space=vmem, size = 0x12000, scoped, tag = 'internal scratch']
  #allocation2 [shape = 'f32[1,1]{1,0:T(1,128)S(1)}', space=vmem, size = 0x200, scoped, tag = 'scoped memory for tpu_custom_call.1']
  %s0 = inlined_call_operand.vmem [shape: s32[8,16], index: 0, kind: input, shape index: {}]
  %s1 = inlined_call_operand.vmem [shape: f32[256,64], index: 1, kind: input, shape index: {}]
  %s2 = inlined_call_operand.vmem [shape: f32[1,64], index: 2, kind: input, shape index: {}]
  %s3 = inlined_call_operand.vmem [shape: f32[16,128], index: 3, kind: input, shape index: {}]
  %s4 = inlined_call_operand.vmem [shape: f32[1,128], index: 4, kind: input, shape index: {}]
  %s5 = inlined_call_operand.vmem [shape: f32[32,128], index: 5, kind: input, shape index: {}]
  %s6 = inlined_call_operand.vmem [shape: f32[32,96], index: 6, kind: input, shape index: {}]
  %s7 = inlined_call_operand.vmem [shape: f32[1,96], index: 7, kind: input, shape index: {}]
  %s8 = inlined_call_operand.vmem [shape: f32[4,32,32], index: 8, kind: input, shape index: {}]
  %s9 = inlined_call_operand.vmem [shape: f32[1,32], index: 9, kind: input, shape index: {}]
  %s10 = inlined_call_operand.vmem [shape: f32[32,1], index: 10, kind: input, shape index: {}]
  %s11 = inlined_call_operand.<no memory space> [shape: f32[1,1], index: 11, kind: input, shape index: {}]
  %s12 = inlined_call_operand.vmem [shape: f32[2,1], index: 12, kind: output, shape index: {}]
  %s13 = sld [smem:[#allocation0]]
  $region58: #{tpu_custom_call.1} parent=0
    _
  %s15 = ssub.s32 1, %s13
  %s16 = scalar_select 0, %s15, %s13
  %v17 = vstv %s11
  %18 = vst [vmem:[#allocation2] sm:$0x1] %v17
  // Predicated region
  $region2: #{tpu_custom_call.1} parent=0 // pred_check
    _
  $region3: #{tpu_custom_call.1} parent=0 // pred_check_branch
    %20 = sbr.rel (0) target = $region5
  $region4: #{tpu_custom_call.1} parent=0 // pred_region
    _
  $region5: #{tpu_custom_call.1} parent=0 // pred_fallthru
    _
  // Predicated region
  $region6: #{tpu_custom_call.1} parent=0 // pred_check
    _
  $region7: #{tpu_custom_call.1} parent=0 // pred_check_branch
    %22 = sbr.rel (0) target = $region9
  $region8: #{tpu_custom_call.1} parent=0 // pred_region
    _
  $region9: #{tpu_custom_call.1} parent=0 // pred_fallthru
    _
  // Predicated region
  $region10: #{tpu_custom_call.1} parent=0 // pred_check
    _
  $region11: #{tpu_custom_call.1} parent=0 // pred_check_branch
    %24 = sbr.rel (0) target = $region13
  $region12: #{tpu_custom_call.1} parent=0 // pred_region
    _
  $region13: #{tpu_custom_call.1} parent=0 // pred_fallthru
    _
  // Predicated region
  $region14: #{tpu_custom_call.1} parent=0 // pred_check
    _
  $region15: #{tpu_custom_call.1} parent=0 // pred_check_branch
    %26 = sbr.rel (0) target = $region17
  $region16: #{tpu_custom_call.1} parent=0 // pred_region
    _
  $region17: #{tpu_custom_call.1} parent=0 // pred_fallthru
    _
  // Predicated region
  $region18: #{tpu_custom_call.1} parent=0 // pred_check
    _
  $region19: #{tpu_custom_call.1} parent=0 // pred_check_branch
    %28 = sbr.rel (0) target = $region21
  $region20: #{tpu_custom_call.1} parent=0 // pred_region
    _
  $region21: #{tpu_custom_call.1} parent=0 // pred_fallthru
    _
  // Predicated region
  $region22: #{tpu_custom_call.1} parent=0 // pred_check
    _
  $region23: #{tpu_custom_call.1} parent=0 // pred_check_branch
    %30 = sbr.rel (0) target = $region25
  $region24: #{tpu_custom_call.1} parent=0 // pred_region
    _
  $region25: #{tpu_custom_call.1} parent=0 // pred_fallthru
    _
  // Predicated region
  $region26: #{tpu_custom_call.1} parent=0 // pred_check
    _
  $region27: #{tpu_custom_call.1} parent=0 // pred_check_branch
    %32 = sbr.rel (0) target = $region29
  $region28: #{tpu_custom_call.1} parent=0 // pred_region
    _
  $region29: #{tpu_custom_call.1} parent=0 // pred_fallthru
    _
  // Predicated region
  $region30: #{tpu_custom_call.1} parent=0 // pred_check
    _
  $region31: #{tpu_custom_call.1} parent=0 // pred_check_branch
    %34 = sbr.rel (0) target = $region33
  $region32: #{tpu_custom_call.1} parent=0 // pred_region
    _
  $region33: #{tpu_custom_call.1} parent=0 // pred_fallthru
    _
  // Predicated region
  $region34: #{tpu_custom_call.1} parent=0 // pred_check
    _
  $region35: #{tpu_custom_call.1} parent=0 // pred_check_branch
    %36 = sbr.rel (0) target = $region37
  $region36: #{tpu_custom_call.1} parent=0 // pred_region
    _
  $region37: #{tpu_custom_call.1} parent=0 // pred_fallthru
    _
  // Predicated region
  $region38: #{tpu_custom_call.1} parent=0 // pred_check
    _
  $region39: #{tpu_custom_call.1} parent=0 // pred_check_branch
    %38 = sbr.rel (0) target = $region41
  $region40: #{tpu_custom_call.1} parent=0 // pred_region
    _
  $region41: #{tpu_custom_call.1} parent=0 // pred_fallthru
    _
  // Predicated region
  $region42: #{tpu_custom_call.1} parent=0 // pred_check
    _
  $region43: #{tpu_custom_call.1} parent=0 // pred_check_branch
    %40 = sbr.rel (0) target = $region45
  $region44: #{tpu_custom_call.1} parent=0 // pred_region
    _
  $region45: #{tpu_custom_call.1} parent=0 // pred_fallthru
    _
  // Predicated region
  $region46: #{tpu_custom_call.1} parent=0 // pred_check
    _
  $region47: #{tpu_custom_call.1} parent=0 // pred_check_branch
    %42 = sbr.rel (0) target = $region49
  $region48: #{tpu_custom_call.1} parent=0 // pred_region
    _
  $region49: #{tpu_custom_call.1} parent=0 // pred_fallthru
    _
  %v43 = vlaneseq
  %v44 = vand.u32 %v43, 127
  %v45 = vadd.s32 %v44, 128
  %v46 = vld [vmem:[%s0] sm:$0xff]
  %47 = vset.pattern.permute.xlu0 0
  %48 = vperm.xlu0 %47, %v46
  %v49 = vpop.permute.xlu0 %48
  %vm50 = vcmp.eq.s32.totalorder %v44, %v49
  %vm51 = vcmp.eq.s32.totalorder %v45, %v49
  %52 = vset.pattern.permute.xlu0 1
  %53 = vperm.xlu0 %52, %v46
  %v54 = vpop.permute.xlu0 %53
  %vm55 = vcmp.eq.s32.totalorder %v44, %v54
  %vm56 = vcmp.eq.s32.totalorder %v45, %v54
  %vm57 = vmor %vm50, %vm55
  %vm58 = vmor %vm51, %vm56
  %59 = vset.pattern.permute.xlu0 2
  %60 = vperm.xlu0 %59, %v46
  %v61 = vpop.permute.xlu0 %60
  %vm62 = vcmp.eq.s32.totalorder %v44, %v61
  %vm63 = vcmp.eq.s32.totalorder %v45, %v61
  %vm64 = vmor %vm57, %vm62
  %vm65 = vmor %vm58, %vm63
  %66 = vset.pattern.permute.xlu0 3
  %67 = vperm.xlu0 %66, %v46
  %v68 = vpop.permute.xlu0 %67
  %vm69 = vcmp.eq.s32.totalorder %v44, %v68
  %vm70 = vcmp.eq.s32.totalorder %v45, %v68
  %vm71 = vmor %vm64, %vm69
  %vm72 = vmor %vm65, %vm70
  %73 = vset.pattern.permute.xlu0 4
  %74 = vperm.xlu0 %73, %v46
  %v75 = vpop.permute.xlu0 %74
  %vm76 = vcmp.eq.s32.totalorder %v44, %v75
  %vm77 = vcmp.eq.s32.totalorder %v45, %v75
  %vm78 = vmor %vm71, %vm76
  %vm79 = vmor %vm72, %vm77
  %80 = vset.pattern.permute.xlu0 5
  %81 = vperm.xlu0 %80, %v46
  %v82 = vpop.permute.xlu0 %81
  %vm83 = vcmp.eq.s32.totalorder %v44, %v82
  %vm84 = vcmp.eq.s32.totalorder %v45, %v82
  %vm85 = vmor %vm78, %vm83
  %vm86 = vmor %vm79, %vm84
  %87 = vset.pattern.permute.xlu0 6
  %88 = vperm.xlu0 %87, %v46
  %v89 = vpop.permute.xlu0 %88
  %vm90 = vcmp.eq.s32.totalorder %v44, %v89
  %vm91 = vcmp.eq.s32.totalorder %v45, %v89
  %vm92 = vmor %vm85, %vm90
  %vm93 = vmor %vm86, %vm91
  %94 = vset.pattern.permute.xlu0 7
  %95 = vperm.xlu0 %94, %v46
  %v96 = vpop.permute.xlu0 %95
  %vm97 = vcmp.eq.s32.totalorder %v44, %v96
  %vm98 = vcmp.eq.s32.totalorder %v45, %v96
  %vm99 = vmor %vm92, %vm97
  %vm100 = vmor %vm93, %vm98
  %101 = vset.pattern.permute.xlu0 8
  %102 = vperm.xlu0 %101, %v46
  %v103 = vpop.permute.xlu0 %102
  %vm104 = vcmp.eq.s32.totalorder %v44, %v103
  %vm105 = vcmp.eq.s32.totalorder %v45, %v103
  %vm106 = vmor %vm99, %vm104
  %vm107 = vmor %vm100, %vm105
  %108 = vset.pattern.permute.xlu0 9
  %109 = vperm.xlu0 %108, %v46
  %v110 = vpop.permute.xlu0 %109
  %vm111 = vcmp.eq.s32.totalorder %v44, %v110
  %vm112 = vcmp.eq.s32.totalorder %v45, %v110
  %vm113 = vmor %vm106, %vm111
  %vm114 = vmor %vm107, %vm112
  %115 = vset.pattern.permute.xlu0 10
  %116 = vperm.xlu0 %115, %v46
  %v117 = vpop.permute.xlu0 %116
  %vm118 = vcmp.eq.s32.totalorder %v44, %v117
  %vm119 = vcmp.eq.s32.totalorder %v45, %v117
  %vm120 = vmor %vm113, %vm118
  %vm121 = vmor %vm114, %vm119
  %122 = vset.pattern.permute.xlu0 11
  %123 = vperm.xlu0 %122, %v46
  %v124 = vpop.permute.xlu0 %123
  %vm125 = vcmp.eq.s32.totalorder %v44, %v124
  %vm126 = vcmp.eq.s32.totalorder %v45, %v124
  %vm127 = vmor %vm120, %vm125
  %vm128 = vmor %vm121, %vm126
  %129 = vset.pattern.permute.xlu0 12
  %130 = vperm.xlu0 %129, %v46
  %v131 = vpop.permute.xlu0 %130
  %vm132 = vcmp.eq.s32.totalorder %v44, %v131
  %vm133 = vcmp.eq.s32.totalorder %v45, %v131
  %vm134 = vmor %vm127, %vm132
  %vm135 = vmor %vm128, %vm133
  %136 = vset.pattern.permute.xlu0 13
  %137 = vperm.xlu0 %136, %v46
  %v138 = vpop.permute.xlu0 %137
  %vm139 = vcmp.eq.s32.totalorder %v44, %v138
  %vm140 = vcmp.eq.s32.totalorder %v45, %v138
  %vm141 = vmor %vm134, %vm139
  %vm142 = vmor %vm135, %vm140
  %143 = vset.pattern.permute.xlu0 14
  %144 = vperm.xlu0 %143, %v46
  %v145 = vpop.permute.xlu0 %144
  %vm146 = vcmp.eq.s32.totalorder %v44, %v145
  %vm147 = vcmp.eq.s32.totalorder %v45, %v145
  %vm148 = vmor %vm141, %vm146
  %vm149 = vmor %vm142, %vm147
  %150 = vset.pattern.permute.xlu0 15
  %151 = vperm.xlu0 %150, %v46
  %v152 = vpop.permute.xlu0 %151
  %vm153 = vcmp.eq.s32.totalorder %v44, %v152
  %vm154 = vcmp.eq.s32.totalorder %v45, %v152
  %vm155 = vmor %vm148, %vm153
  %vm156 = vmor %vm149, %vm154
  %v157 = vsel %vm155, 1, 0
  %v158 = vsel %vm156, 1, 0
  %v159 = vcvt.s32.f32 %v157
  %v160 = vcvt.s32.f32 %v158
  %v161 = vld [vmem:[%s1] sm:$0xff]
  %v162 = vld [vmem:[%s1 + $0x8] sm:$0xff]
  %v163 = vld [vmem:[%s1 + $0x10] sm:$0xff]
  %v164 = vld [vmem:[%s1 + $0x18] sm:$0xff]
  %v165 = vld [vmem:[%s1 + $0x20] sm:$0xff]
  %v166 = vld [vmem:[%s1 + $0x28] sm:$0xff]
  %v167 = vld [vmem:[%s1 + $0x30] sm:$0xff]
  %v168 = vld [vmem:[%s1 + $0x38] sm:$0xff]
  %v169 = vld [vmem:[%s1 + $0x40] sm:$0xff]
  %v170 = vld [vmem:[%s1 + $0x48] sm:$0xff]
  %v171 = vld [vmem:[%s1 + $0x50] sm:$0xff]
  %v172 = vld [vmem:[%s1 + $0x58] sm:$0xff]
  %v173 = vld [vmem:[%s1 + $0x60] sm:$0xff]
  %v174 = vld [vmem:[%s1 + $0x68] sm:$0xff]
  %v175 = vld [vmem:[%s1 + $0x70] sm:$0xff]
  %v176 = vld [vmem:[%s1 + $0x78] sm:$0xff]
  %v177 = vld [vmem:[%s1 + $0x80] sm:$0xff]
  %v178 = vld [vmem:[%s1 + $0x88] sm:$0xff]
  %v179 = vld [vmem:[%s1 + $0x90] sm:$0xff]
  %v180 = vld [vmem:[%s1 + $0x98] sm:$0xff]
  %v181 = vld [vmem:[%s1 + $0xa0] sm:$0xff]
  %v182 = vld [vmem:[%s1 + $0xa8] sm:$0xff]
  %v183 = vld [vmem:[%s1 + $0xb0] sm:$0xff]
  %v184 = vld [vmem:[%s1 + $0xb8] sm:$0xff]
  %v185 = vld [vmem:[%s1 + $0xc0] sm:$0xff]
  %v186 = vld [vmem:[%s1 + $0xc8] sm:$0xff]
  %v187 = vld [vmem:[%s1 + $0xd0] sm:$0xff]
  %v188 = vld [vmem:[%s1 + $0xd8] sm:$0xff]
  %v189 = vld [vmem:[%s1 + $0xe0] sm:$0xff]
  %v190 = vld [vmem:[%s1 + $0xe8] sm:$0xff]
  %v191 = vld [vmem:[%s1 + $0xf0] sm:$0xff]
  %v192 = vld [vmem:[%s1 + $0xf8] sm:$0xff]
  %v193 = vld [vmem:[%s2] sm:$0x1]
  %v195 = vlaneseq
  %v196 = vshrl.u32 %v195, 7
  %v197 = vsub.s32 0, %v196
  %v198 = vrot.slane %v193, %v197
  %200 = vmatprep.subr.mxu0 0.0
  %201 = vmatpush1.msra.mxu0 %v161
  %202 = vmatprep.subr.mxu0 0.0
  %203 = vmatpush1.msra.mxu0 %v162
  %204 = vmatprep.subr.mxu0 0.0
  %205 = vmatpush1.msra.mxu0 %v163
  %206 = vmatprep.subr.mxu0 0.0
  %207 = vmatpush1.msra.mxu0 %v164
  %208 = vmatprep.subr.mxu0 0.0
  %209 = vmatpush1.msra.mxu0 %v165
  %210 = vmatprep.subr.mxu0 0.0
  %211 = vmatpush1.msra.mxu0 %v166
  %212 = vmatprep.subr.mxu0 0.0
  %213 = vmatpush1.msra.mxu0 %v167
  %214 = vmatprep.subr.mxu0 0.0
  %215 = vmatpush1.msra.mxu0 %v168
  %216 = vmatprep.subr.mxu0 0.0
  %217 = vmatpush1.msra.mxu0 %v169
  %218 = vmatprep.subr.mxu0 0.0
  %219 = vmatpush1.msra.mxu0 %v170
  %220 = vmatprep.subr.mxu0 0.0
  %221 = vmatpush1.msra.mxu0 %v171
  %222 = vmatprep.subr.mxu0 0.0
  %223 = vmatpush1.msra.mxu0 %v172
  %224 = vmatprep.subr.mxu0 0.0
  %225 = vmatpush1.msra.mxu0 %v173
  %226 = vmatprep.subr.mxu0 0.0
  %227 = vmatpush1.msra.mxu0 %v174
  %228 = vmatprep.subr.mxu0 0.0
  %229 = vmatpush1.msra.mxu0 %v175
  %230 = vmatprep.subr.mxu0 0.0
  %231 = vmatpush1.msra.mxu0 %v176
  %232 = vmatprep.subr.mxu0 0.0
  %233 = vmatpush1.msra.mxu0 %v177
  %234 = vmatprep.subr.mxu0 0.0
  %235 = vmatpush1.msra.mxu0 %v178
  %236 = vmatprep.subr.mxu0 0.0
  %237 = vmatpush1.msra.mxu0 %v179
  %238 = vmatprep.subr.mxu0 0.0
  %239 = vmatpush1.msra.mxu0 %v180
  %240 = vmatprep.subr.mxu0 0.0
  %241 = vmatpush1.msra.mxu0 %v181
  %242 = vmatprep.subr.mxu0 0.0
  %243 = vmatpush1.msra.mxu0 %v182
  %244 = vmatprep.subr.mxu0 0.0
  %245 = vmatpush1.msra.mxu0 %v183
  %246 = vmatprep.subr.mxu0 0.0
  %247 = vmatpush1.msra.mxu0 %v184
  %248 = vmatprep.subr.mxu0 0.0
  %249 = vmatpush1.msra.mxu0 %v185
  %250 = vmatprep.subr.mxu0 0.0
  %251 = vmatpush1.msra.mxu0 %v186
  %252 = vmatprep.subr.mxu0 0.0
  %253 = vmatpush1.msra.mxu0 %v187
  %254 = vmatprep.subr.mxu0 0.0
  %255 = vmatpush1.msra.mxu0 %v188
  %256 = vmatprep.subr.mxu0 0.0
  %257 = vmatpush1.msra.mxu0 %v189
  %258 = vmatprep.subr.mxu0 0.0
  %259 = vmatpush1.msra.mxu0 %v190
  %260 = vmatprep.subr.mxu0 0.0
  %261 = vmatpush1.msra.mxu0 %v191
  %262 = vmatprep.subr.mxu0 0.0
  %263 = vmatpush1.msra.mxu0 %v192
  %264 = vmatprep.mubr.f32.mxu0 %v160
  %265 = vmatmul.mubr.f32.gmra.mrb[0].mxu0 %v159
  %v266 = vpop.f32.mrb[0].mxu0
  %v267 = vadd.f32 %v198, %v266
  %v268 = vpop.f32.mrb[0].mxu0
  %269 = vdwg.mxu0
  %v270 = vmax.f32 %v267, 0.0
  %272 = vrot.lane.b32.xlu0 %v270, 112
  %v273 = vpop.permute.xlu0 %272
  %v275 = vmax.f32 %v270, %v273
  %277 = vrot.lane.b32.xlu0 %v275, 96
  %v278 = vpop.permute.xlu0 %277
  %v280 = vmax.f32 %v275, %v278
  %v281 = vld [vmem:[%s3] sm:$0xff]
  %v282 = vld [vmem:[%s3 + $0x8] sm:$0xff]
  %v283 = vld [vmem:[%s4] sm:$0x1]
  %v285 = vlaneseq
  %v286 = vshrl.u32 %v285, 7
  %v287 = vsub.s32 0, %v286
  %v288 = vrot.slane %v283, %v287
  %vm290 = vcmask 130048
  %v292 = vsel %vm290, %v280, 0
  %294 = vmatprep.subr.mxu0 0.0
  %295 = vmatpush1.msra.mxu0 %v281
  %296 = vmatprep.subr.mxu0 0.0
  %297 = vmatpush1.msra.mxu0 %v282
  %298 = vmatprep.subr.mxu0 0.0
  %299 = vmatpush1.msra.mxu0 0.0
  %300 = vmatprep.subr.mxu0 0.0
  %301 = vmatpush1.msra.mxu0 0.0
  %302 = vmatprep.subr.mxu0 0.0
  %303 = vmatpush1.msra.mxu0 0.0
  %304 = vmatprep.subr.mxu0 0.0
  %305 = vmatpush1.msra.mxu0 0.0
  %306 = vmatprep.subr.mxu0 0.0
  %307 = vmatpush1.msra.mxu0 0.0
  %308 = vmatprep.subr.mxu0 0.0
  %309 = vmatpush1.msra.mxu0 0.0
  %310 = vmatprep.subr.mxu0 0.0
  %311 = vmatpush1.msra.mxu0 0.0
  %312 = vmatprep.subr.mxu0 0.0
  %313 = vmatpush1.msra.mxu0 0.0
  %314 = vmatprep.subr.mxu0 0.0
  %315 = vmatpush1.msra.mxu0 0.0
  %316 = vmatprep.subr.mxu0 0.0
  %317 = vmatpush1.msra.mxu0 0.0
  %318 = vmatprep.subr.mxu0 0.0
  %319 = vmatpush1.msra.mxu0 0.0
  %320 = vmatprep.subr.mxu0 0.0
  %321 = vmatpush1.msra.mxu0 0.0
  %322 = vmatprep.subr.mxu0 0.0
  %323 = vmatpush1.msra.mxu0 0.0
  %324 = vmatprep.subr.mxu0 0.0
  %325 = vmatpush1.msra.mxu0 0.0
  %326 = vmatprep.subr.mxu0 0.0
  %327 = vmatpush1.msra.mxu0 0.0
  %328 = vmatprep.subr.mxu0 0.0
  %329 = vmatpush1.msra.mxu0 0.0
  %330 = vmatprep.subr.mxu0 0.0
  %331 = vmatpush1.msra.mxu0 0.0
  %332 = vmatprep.subr.mxu0 0.0
  %333 = vmatpush1.msra.mxu0 0.0
  %334 = vmatprep.subr.mxu0 0.0
  %335 = vmatpush1.msra.mxu0 0.0
  %336 = vmatprep.subr.mxu0 0.0
  %337 = vmatpush1.msra.mxu0 0.0
  %338 = vmatprep.subr.mxu0 0.0
  %339 = vmatpush1.msra.mxu0 0.0
  %340 = vmatprep.subr.mxu0 0.0
  %341 = vmatpush1.msra.mxu0 0.0
  %342 = vmatprep.subr.mxu0 0.0
  %343 = vmatpush1.msra.mxu0 0.0
  %344 = vmatprep.subr.mxu0 0.0
  %345 = vmatpush1.msra.mxu0 0.0
  %346 = vmatprep.subr.mxu0 0.0
  %347 = vmatpush1.msra.mxu0 0.0
  %348 = vmatprep.subr.mxu0 0.0
  %349 = vmatpush1.msra.mxu0 0.0
  %350 = vmatprep.subr.mxu0 0.0
  %351 = vmatpush1.msra.mxu0 0.0
  %352 = vmatprep.subr.mxu0 0.0
  %353 = vmatpush1.msra.mxu0 0.0
  %354 = vmatprep.subr.mxu0 0.0
  %355 = vmatpush1.msra.mxu0 0.0
  %356 = vmatprep.subr.mxu0 0.0
  %357 = vmatpush1.msra.mxu0 0.0
  %358 = vmatprep.mubr.f32.mxu0 0.0
  %359 = vmatmul.mubr.f32.gmra.mrb[0].mxu0 %v292
  %v360 = vpop.f32.mrb[0].mxu0
  %v361 = vadd.f32 %v288, %v360
  %v362 = vpop.f32.mrb[0].mxu0
  %363 = vdwg.mxu0
  %v364 = vld [vmem:[%s5] sm:$0xff]
  %v365 = vld [vmem:[%s5 + $0x8] sm:$0xff]
  %v366 = vld [vmem:[%s5 + $0x10] sm:$0xff]
  %v367 = vld [vmem:[%s5 + $0x18] sm:$0xff]
  %vm368 = vcmp.lt.s32.totalorder %v44, 0
  %v369 = vsub.s32 0, %v44
  %v370 = vsel %vm368, %v369, %v44
  %v371 = vshrl.u32 %v370, 5
  %v372 = vand.u32 %v370, 31
  %v373 = vsub.s32 0, %v372
  %v374 = vsel %vm368, %v373, %v372
  %vm375 = vcmp.ne.s32.totalorder %v374, 0
  %vm376 = vcmp.lt.s32.totalorder %v374, 0
  %vm377 = vmand %vm376, %vm375
  %v378 = vadd.s32 %v374, 32
  %v379 = vsel %vm377, %v378, %v374
  %vm380 = vcmp.lt.s32.totalorder %v379, 16
  %vm381 = vcmp.ge.s32.totalorder %v44, 64
  %vm382 = vcmp.lt.s32.totalorder %v44, 96
  %vm383 = vmand %vm381, %vm382
  %v385 = vrot.slane %v361, 6
  %v387 = vsel %vm380, %v361, %v385
  %vm388 = vcmask 261120
  %v390 = vsel %vm388, 0.0, 0
  %392 = vmatprep.subr.mxu0 0.0
  %393 = vmatpush1.msra.mxu0 %v364
  %394 = vmatprep.subr.mxu0 0.0
  %395 = vmatpush1.msra.mxu0 %v365
  %396 = vmatprep.subr.mxu0 0.0
  %397 = vmatpush1.msra.mxu0 %v366
  %398 = vmatprep.subr.mxu0 0.0
  %399 = vmatpush1.msra.mxu0 %v367
  %400 = vmatprep.subr.mxu0 0.0
  %401 = vmatpush1.msra.mxu0 0.0
  %402 = vmatprep.subr.mxu0 0.0
  %403 = vmatpush1.msra.mxu0 0.0
  %404 = vmatprep.subr.mxu0 0.0
  %405 = vmatpush1.msra.mxu0 0.0
  %406 = vmatprep.subr.mxu0 0.0
  %407 = vmatpush1.msra.mxu0 0.0
  %408 = vmatprep.subr.mxu0 0.0
  %409 = vmatpush1.msra.mxu0 0.0
  %410 = vmatprep.subr.mxu0 0.0
  %411 = vmatpush1.msra.mxu0 0.0
  %412 = vmatprep.subr.mxu0 0.0
  %413 = vmatpush1.msra.mxu0 0.0
  %414 = vmatprep.subr.mxu0 0.0
  %415 = vmatpush1.msra.mxu0 0.0
  %416 = vmatprep.subr.mxu0 0.0
  %417 = vmatpush1.msra.mxu0 0.0
  %418 = vmatprep.subr.mxu0 0.0
  %419 = vmatpush1.msra.mxu0 0.0
  %420 = vmatprep.subr.mxu0 0.0
  %421 = vmatpush1.msra.mxu0 0.0
  %422 = vmatprep.subr.mxu0 0.0
  %423 = vmatpush1.msra.mxu0 0.0
  %424 = vmatprep.subr.mxu0 0.0
  %425 = vmatpush1.msra.mxu0 0.0
  %426 = vmatprep.subr.mxu0 0.0
  %427 = vmatpush1.msra.mxu0 0.0
  %428 = vmatprep.subr.mxu0 0.0
  %429 = vmatpush1.msra.mxu0 0.0
  %430 = vmatprep.subr.mxu0 0.0
  %431 = vmatpush1.msra.mxu0 0.0
  %432 = vmatprep.subr.mxu0 0.0
  %433 = vmatpush1.msra.mxu0 0.0
  %434 = vmatprep.subr.mxu0 0.0
  %435 = vmatpush1.msra.mxu0 0.0
  %436 = vmatprep.subr.mxu0 0.0
  %437 = vmatpush1.msra.mxu0 0.0
  %438 = vmatprep.subr.mxu0 0.0
  %439 = vmatpush1.msra.mxu0 0.0
  %440 = vmatprep.subr.mxu0 0.0
  %441 = vmatpush1.msra.mxu0 0.0
  %442 = vmatprep.subr.mxu0 0.0
  %443 = vmatpush1.msra.mxu0 0.0
  %444 = vmatprep.subr.mxu0 0.0
  %445 = vmatpush1.msra.mxu0 0.0
  %446 = vmatprep.subr.mxu0 0.0
  %447 = vmatpush1.msra.mxu0 0.0
  %448 = vmatprep.subr.mxu0 0.0
  %449 = vmatpush1.msra.mxu0 0.0
  %450 = vmatprep.subr.mxu0 0.0
  %451 = vmatpush1.msra.mxu0 0.0
  %452 = vmatprep.subr.mxu0 0.0
  %453 = vmatpush1.msra.mxu0 0.0
  %454 = vmatprep.subr.mxu0 0.0
  %455 = vmatpush1.msra.mxu0 0.0
  %456 = vmatprep.mubr.f32.mxu0 0.0
  %457 = vmatmul.mubr.f32.gmra.mrb[0].mxu0 %v390
  %v458 = vpop.f32.mrb[0].mxu0
  %v459 = vadd.f32 0.0, %v458
  %v460 = vpop.f32.mrb[0].mxu0
  %461 = vdwg.mxu0
  %v462 = vadd.f32 %v387, %v459
  %v463 = vtanh.pop %v462
  %v464 = vmul.f32 %v462, 0.5
  %v465 = vtanh.pop %v464
  %v466 = vadd.f32 %v465, 1.0
  %v467 = vmul.f32 %v466, 0.5
  %v468 = vsel %vm383, %v463, %v467
  %v469 = vmul.f32 %v468, 0.0
  %471 = vrot.lane.b32.xlu0 %v468, 64
  %v472 = vpop.permute.xlu0 %471
  %v474 = vmul.f32 %v468, %v472
  %476 = vrot.lane.b32.xlu0 %v474, 32
  %v477 = vpop.permute.xlu0 %476
  %v479 = vadd.f32 %v469, %v477
  %v480 = vtanh.pop %v479
  %482 = vrot.lane.b32.xlu0 %v480, 64
  %v483 = vpop.permute.xlu0 %482
  %v485 = vmul.f32 %v468, %v483
  %v486 = vrot.slane %v361, 2
  %v488 = vsel %vm380, %v361, %v486
  %490 = vrot.lane.b32.xlu0 %v485, 32
  %v491 = vpop.permute.xlu0 %490
  %v492 = vsel %vm388, %v491, 0
  %494 = vmatprep.subr.mxu0 0.0
  %495 = vmatpush1.msra.mxu0 %v364
  %496 = vmatprep.subr.mxu0 0.0
  %497 = vmatpush1.msra.mxu0 %v365
  %498 = vmatprep.subr.mxu0 0.0
  %499 = vmatpush1.msra.mxu0 %v366
  %500 = vmatprep.subr.mxu0 0.0
  %501 = vmatpush1.msra.mxu0 %v367
  %502 = vmatprep.subr.mxu0 0.0
  %503 = vmatpush1.msra.mxu0 0.0
  %504 = vmatprep.subr.mxu0 0.0
  %505 = vmatpush1.msra.mxu0 0.0
  %506 = vmatprep.subr.mxu0 0.0
  %507 = vmatpush1.msra.mxu0 0.0
  %508 = vmatprep.subr.mxu0 0.0
  %509 = vmatpush1.msra.mxu0 0.0
  %510 = vmatprep.subr.mxu0 0.0
  %511 = vmatpush1.msra.mxu0 0.0
  %512 = vmatprep.subr.mxu0 0.0
  %513 = vmatpush1.msra.mxu0 0.0
  %514 = vmatprep.subr.mxu0 0.0
  %515 = vmatpush1.msra.mxu0 0.0
  %516 = vmatprep.subr.mxu0 0.0
  %517 = vmatpush1.msra.mxu0 0.0
  %518 = vmatprep.subr.mxu0 0.0
  %519 = vmatpush1.msra.mxu0 0.0
  %520 = vmatprep.subr.mxu0 0.0
  %521 = vmatpush1.msra.mxu0 0.0
  %522 = vmatprep.subr.mxu0 0.0
  %523 = vmatpush1.msra.mxu0 0.0
  %524 = vmatprep.subr.mxu0 0.0
  %525 = vmatpush1.msra.mxu0 0.0
  %526 = vmatprep.subr.mxu0 0.0
  %527 = vmatpush1.msra.mxu0 0.0
  %528 = vmatprep.subr.mxu0 0.0
  %529 = vmatpush1.msra.mxu0 0.0
  %530 = vmatprep.subr.mxu0 0.0
  %531 = vmatpush1.msra.mxu0 0.0
  %532 = vmatprep.subr.mxu0 0.0
  %533 = vmatpush1.msra.mxu0 0.0
  %534 = vmatprep.subr.mxu0 0.0
  %535 = vmatpush1.msra.mxu0 0.0
  %536 = vmatprep.subr.mxu0 0.0
  %537 = vmatpush1.msra.mxu0 0.0
  %538 = vmatprep.subr.mxu0 0.0
  %539 = vmatpush1.msra.mxu0 0.0
  %540 = vmatprep.subr.mxu0 0.0
  %541 = vmatpush1.msra.mxu0 0.0
  %542 = vmatprep.subr.mxu0 0.0
  %543 = vmatpush1.msra.mxu0 0.0
  %544 = vmatprep.subr.mxu0 0.0
  %545 = vmatpush1.msra.mxu0 0.0
  %546 = vmatprep.subr.mxu0 0.0
  %547 = vmatpush1.msra.mxu0 0.0
  %548 = vmatprep.subr.mxu0 0.0
  %549 = vmatpush1.msra.mxu0 0.0
  %550 = vmatprep.subr.mxu0 0.0
  %551 = vmatpush1.msra.mxu0 0.0
  %552 = vmatprep.subr.mxu0 0.0
  %553 = vmatpush1.msra.mxu0 0.0
  %554 = vmatprep.subr.mxu0 0.0
  %555 = vmatpush1.msra.mxu0 0.0
  %556 = vmatprep.subr.mxu0 0.0
  %557 = vmatpush1.msra.mxu0 0.0
  %558 = vmatprep.mubr.f32.mxu0 0.0
  %559 = vmatmul.mubr.f32.gmra.mrb[0].mxu0 %v492
  %v560 = vpop.f32.mrb[0].mxu0
  %v561 = vadd.f32 0.0, %v560
  %v562 = vpop.f32.mrb[0].mxu0
  %563 = vdwg.mxu0
  %v565 = vrot.slane %v561, 6
  %v567 = vadd.f32 %v488, %v565
  %v568 = vtanh.pop %v567
  %v569 = vmul.f32 %v567, 0.5
  %v570 = vtanh.pop %v569
  %v571 = vadd.f32 %v570, 1.0
  %v572 = vmul.f32 %v571, 0.5
  %v573 = vsel %vm383, %v568, %v572
  %v575 = vrot.slane %v479, 6
  %v577 = vmul.f32 %v573, %v575
  %579 = vrot.lane.b32.xlu0 %v573, 64
  %v580 = vpop.permute.xlu0 %579
  %v582 = vmul.f32 %v573, %v580
  %584 = vrot.lane.b32.xlu0 %v582, 32
  %v585 = vpop.permute.xlu0 %584
  %v587 = vadd.f32 %v577, %v585
  %v588 = vtanh.pop %v587
  %590 = vrot.lane.b32.xlu0 %v588, 64
  %v591 = vpop.permute.xlu0 %590
  %v593 = vmul.f32 %v573, %v591
  %v595 = vrot.slane %v593, 2
  %596 = vrot.lane.b32.xlu0 %v595, 32
  %v597 = vpop.permute.xlu0 %596
  %v598 = vsel %vm388, %v597, 0
  %600 = vmatprep.subr.mxu0 0.0
  %601 = vmatpush1.msra.mxu0 %v364
  %602 = vmatprep.subr.mxu0 0.0
  %603 = vmatpush1.msra.mxu0 %v365
  %604 = vmatprep.subr.mxu0 0.0
  %605 = vmatpush1.msra.mxu0 %v366
  %606 = vmatprep.subr.mxu0 0.0
  %607 = vmatpush1.msra.mxu0 %v367
  %608 = vmatprep.subr.mxu0 0.0
  %609 = vmatpush1.msra.mxu0 0.0
  %610 = vmatprep.subr.mxu0 0.0
  %611 = vmatpush1.msra.mxu0 0.0
  %612 = vmatprep.subr.mxu0 0.0
  %613 = vmatpush1.msra.mxu0 0.0
  %614 = vmatprep.subr.mxu0 0.0
  %615 = vmatpush1.msra.mxu0 0.0
  %616 = vmatprep.subr.mxu0 0.0
  %617 = vmatpush1.msra.mxu0 0.0
  %618 = vmatprep.subr.mxu0 0.0
  %619 = vmatpush1.msra.mxu0 0.0
  %620 = vmatprep.subr.mxu0 0.0
  %621 = vmatpush1.msra.mxu0 0.0
  %622 = vmatprep.subr.mxu0 0.0
  %623 = vmatpush1.msra.mxu0 0.0
  %624 = vmatprep.subr.mxu0 0.0
  %625 = vmatpush1.msra.mxu0 0.0
  %626 = vmatprep.subr.mxu0 0.0
  %627 = vmatpush1.msra.mxu0 0.0
  %628 = vmatprep.subr.mxu0 0.0
  %629 = vmatpush1.msra.mxu0 0.0
  %630 = vmatprep.subr.mxu0 0.0
  %631 = vmatpush1.msra.mxu0 0.0
  %632 = vmatprep.subr.mxu0 0.0
  %633 = vmatpush1.msra.mxu0 0.0
  %634 = vmatprep.subr.mxu0 0.0
  %635 = vmatpush1.msra.mxu0 0.0
  %636 = vmatprep.subr.mxu0 0.0
  %637 = vmatpush1.msra.mxu0 0.0
  %638 = vmatprep.subr.mxu0 0.0
  %639 = vmatpush1.msra.mxu0 0.0
  %640 = vmatprep.subr.mxu0 0.0
  %641 = vmatpush1.msra.mxu0 0.0
  %642 = vmatprep.subr.mxu0 0.0
  %643 = vmatpush1.msra.mxu0 0.0
  %644 = vmatprep.subr.mxu0 0.0
  %645 = vmatpush1.msra.mxu0 0.0
  %646 = vmatprep.subr.mxu0 0.0
  %647 = vmatpush1.msra.mxu0 0.0
  %648 = vmatprep.subr.mxu0 0.0
  %649 = vmatpush1.msra.mxu0 0.0
  %650 = vmatprep.subr.mxu0 0.0
  %651 = vmatpush1.msra.mxu0 0.0
  %652 = vmatprep.subr.mxu0 0.0
  %653 = vmatpush1.msra.mxu0 0.0
  %654 = vmatprep.subr.mxu0 0.0
  %655 = vmatpush1.msra.mxu0 0.0
  %656 = vmatprep.subr.mxu0 0.0
  %657 = vmatpush1.msra.mxu0 0.0
  %658 = vmatprep.subr.mxu0 0.0
  %659 = vmatpush1.msra.mxu0 0.0
  %660 = vmatprep.subr.mxu0 0.0
  %661 = vmatpush1.msra.mxu0 0.0
  %662 = vmatprep.subr.mxu0 0.0
  %663 = vmatpush1.msra.mxu0 0.0
  %664 = vmatprep.mubr.f32.mxu0 0.0
  %665 = vmatmul.mubr.f32.gmra.mrb[0].mxu0 %v598
  %v666 = vpop.f32.mrb[0].mxu0
  %v667 = vadd.f32 0.0, %v666
  %v668 = vpop.f32.mrb[0].mxu0
  %669 = vdwg.mxu0
  %v671 = vrot.slane %v667, 4
  %v673 = vadd.f32 %v387, %v671
  %v674 = vtanh.pop %v673
  %v675 = vmul.f32 %v673, 0.5
  %v676 = vtanh.pop %v675
  %v677 = vadd.f32 %v676, 1.0
  %v678 = vmul.f32 %v677, 0.5
  %v679 = vsel %vm383, %v674, %v678
  %v681 = vrot.slane %v587, 6
  %v683 = vmul.f32 %v679, %v681
  %685 = vrot.lane.b32.xlu0 %v679, 64
  %v686 = vpop.permute.xlu0 %685
  %v688 = vmul.f32 %v679, %v686
  %690 = vrot.lane.b32.xlu0 %v688, 32
  %v691 = vpop.permute.xlu0 %690
  %v693 = vadd.f32 %v683, %v691
  %v694 = vtanh.pop %v693
  %696 = vrot.lane.b32.xlu0 %v694, 64
  %v697 = vpop.permute.xlu0 %696
  %v699 = vmul.f32 %v679, %v697
  %v701 = vrot.slane %v699, 4
  %702 = vrot.lane.b32.xlu0 %v701, 32
  %v703 = vpop.permute.xlu0 %702
  %v704 = vsel %vm388, %v703, 0
  %706 = vmatprep.subr.mxu0 0.0
  %707 = vmatpush1.msra.mxu0 %v364
  %708 = vmatprep.subr.mxu0 0.0
  %709 = vmatpush1.msra.mxu0 %v365
  %710 = vmatprep.subr.mxu0 0.0
  %711 = vmatpush1.msra.mxu0 %v366
  %712 = vmatprep.subr.mxu0 0.0
  %713 = vmatpush1.msra.mxu0 %v367
  %714 = vmatprep.subr.mxu0 0.0
  %715 = vmatpush1.msra.mxu0 0.0
  %716 = vmatprep.subr.mxu0 0.0
  %717 = vmatpush1.msra.mxu0 0.0
  %718 = vmatprep.subr.mxu0 0.0
  %719 = vmatpush1.msra.mxu0 0.0
  %720 = vmatprep.subr.mxu0 0.0
  %721 = vmatpush1.msra.mxu0 0.0
  %722 = vmatprep.subr.mxu0 0.0
  %723 = vmatpush1.msra.mxu0 0.0
  %724 = vmatprep.subr.mxu0 0.0
  %725 = vmatpush1.msra.mxu0 0.0
  %726 = vmatprep.subr.mxu0 0.0
  %727 = vmatpush1.msra.mxu0 0.0
  %728 = vmatprep.subr.mxu0 0.0
  %729 = vmatpush1.msra.mxu0 0.0
  %730 = vmatprep.subr.mxu0 0.0
  %731 = vmatpush1.msra.mxu0 0.0
  %732 = vmatprep.subr.mxu0 0.0
  %733 = vmatpush1.msra.mxu0 0.0
  %734 = vmatprep.subr.mxu0 0.0
  %735 = vmatpush1.msra.mxu0 0.0
  %736 = vmatprep.subr.mxu0 0.0
  %737 = vmatpush1.msra.mxu0 0.0
  %738 = vmatprep.subr.mxu0 0.0
  %739 = vmatpush1.msra.mxu0 0.0
  %740 = vmatprep.subr.mxu0 0.0
  %741 = vmatpush1.msra.mxu0 0.0
  %742 = vmatprep.subr.mxu0 0.0
  %743 = vmatpush1.msra.mxu0 0.0
  %744 = vmatprep.subr.mxu0 0.0
  %745 = vmatpush1.msra.mxu0 0.0
  %746 = vmatprep.subr.mxu0 0.0
  %747 = vmatpush1.msra.mxu0 0.0
  %748 = vmatprep.subr.mxu0 0.0
  %749 = vmatpush1.msra.mxu0 0.0
  %750 = vmatprep.subr.mxu0 0.0
  %751 = vmatpush1.msra.mxu0 0.0
  %752 = vmatprep.subr.mxu0 0.0
  %753 = vmatpush1.msra.mxu0 0.0
  %754 = vmatprep.subr.mxu0 0.0
  %755 = vmatpush1.msra.mxu0 0.0
  %756 = vmatprep.subr.mxu0 0.0
  %757 = vmatpush1.msra.mxu0 0.0
  %758 = vmatprep.subr.mxu0 0.0
  %759 = vmatpush1.msra.mxu0 0.0
  %760 = vmatprep.subr.mxu0 0.0
  %761 = vmatpush1.msra.mxu0 0.0
  %762 = vmatprep.subr.mxu0 0.0
  %763 = vmatpush1.msra.mxu0 0.0
  %764 = vmatprep.subr.mxu0 0.0
  %765 = vmatpush1.msra.mxu0 0.0
  %766 = vmatprep.subr.mxu0 0.0
  %767 = vmatpush1.msra.mxu0 0.0
  %768 = vmatprep.subr.mxu0 0.0
  %769 = vmatpush1.msra.mxu0 0.0
  %770 = vmatprep.mubr.f32.mxu0 0.0
  %771 = vmatmul.mubr.f32.gmra.mrb[0].mxu0 %v704
  %v772 = vpop.f32.mrb[0].mxu0
  %v773 = vadd.f32 0.0, %v772
  %v774 = vpop.f32.mrb[0].mxu0
  %775 = vdwg.mxu0
  %v777 = vrot.slane %v773, 2
  %v779 = vadd.f32 %v488, %v777
  %v780 = vtanh.pop %v779
  %v781 = vmul.f32 %v779, 0.5
  %v782 = vtanh.pop %v781
  %v783 = vadd.f32 %v782, 1.0
  %v784 = vmul.f32 %v783, 0.5
  %v785 = vsel %vm383, %v780, %v784
  %v787 = vrot.slane %v693, 6
  %v789 = vmul.f32 %v785, %v787
  %791 = vrot.lane.b32.xlu0 %v785, 64
  %v792 = vpop.permute.xlu0 %791
  %v794 = vmul.f32 %v785, %v792
  %796 = vrot.lane.b32.xlu0 %v794, 32
  %v797 = vpop.permute.xlu0 %796
  %v799 = vadd.f32 %v789, %v797
  %v800 = vtanh.pop %v799
  %802 = vrot.lane.b32.xlu0 %v800, 64
  %v803 = vpop.permute.xlu0 %802
  %v805 = vmul.f32 %v785, %v803
  %vm806 = vcmp.lt.s32.totalorder %v44, 16
  %v809 = vrot.slane %v805, 6
  %810 = vrot.lane.b32.xlu0 %v809, 32
  %v811 = vpop.permute.xlu0 %810
  %v813 = vsel %vm806, %v491, %v811
  %v816 = vsel %vm806, %v597, %v703
  %v817 = vsel %vm806, %v703, %v597
  %v818 = vsel %vm806, %v811, %v491
  %v820 = vrot.slane %v816, 6
  %v823 = vrot.slane %v817, 4
  %v826 = vrot.slane %v818, 2
  %vm828 = vcmask 1041408
  %v829 = vsel %vm828, %v813, %v820
  %vm830 = vcmask 1043456
  %v831 = vsel %vm830, %v829, %v823
  %vm832 = vcmask 1045504
  %v833 = vsel %vm832, %v831, %v826
  %v834 = vld [vmem:[%s6] sm:$0xff]
  %v835 = vld [vmem:[%s6 + $0x8] sm:$0xff]
  %v836 = vld [vmem:[%s6 + $0x10] sm:$0xff]
  %v837 = vld [vmem:[%s6 + $0x18] sm:$0xff]
  %v838 = vld [vmem:[%s7] sm:$0x1]
  %v840 = vlaneseq
  %v841 = vshrl.u32 %v840, 7
  %v842 = vsub.s32 0, %v841
  %v843 = vrot.slane %v838, %v842
  %v846 = vsel %vm388, %v833, 0
  %848 = vmatprep.subr.mxu0 0.0
  %849 = vmatpush1.msra.mxu0 %v834
  %850 = vmatprep.subr.mxu0 0.0
  %851 = vmatpush1.msra.mxu0 %v835
  %852 = vmatprep.subr.mxu0 0.0
  %853 = vmatpush1.msra.mxu0 %v836
  %854 = vmatprep.subr.mxu0 0.0
  %855 = vmatpush1.msra.mxu0 %v837
  %856 = vmatprep.subr.mxu0 0.0
  %857 = vmatpush1.msra.mxu0 0.0
  %858 = vmatprep.subr.mxu0 0.0
  %859 = vmatpush1.msra.mxu0 0.0
  %860 = vmatprep.subr.mxu0 0.0
  %861 = vmatpush1.msra.mxu0 0.0
  %862 = vmatprep.subr.mxu0 0.0
  %863 = vmatpush1.msra.mxu0 0.0
  %864 = vmatprep.subr.mxu0 0.0
  %865 = vmatpush1.msra.mxu0 0.0
  %866 = vmatprep.subr.mxu0 0.0
  %867 = vmatpush1.msra.mxu0 0.0
  %868 = vmatprep.subr.mxu0 0.0
  %869 = vmatpush1.msra.mxu0 0.0
  %870 = vmatprep.subr.mxu0 0.0
  %871 = vmatpush1.msra.mxu0 0.0
  %872 = vmatprep.subr.mxu0 0.0
  %873 = vmatpush1.msra.mxu0 0.0
  %874 = vmatprep.subr.mxu0 0.0
  %875 = vmatpush1.msra.mxu0 0.0
  %876 = vmatprep.subr.mxu0 0.0
  %877 = vmatpush1.msra.mxu0 0.0
  %878 = vmatprep.subr.mxu0 0.0
  %879 = vmatpush1.msra.mxu0 0.0
  %880 = vmatprep.subr.mxu0 0.0
  %881 = vmatpush1.msra.mxu0 0.0
  %882 = vmatprep.subr.mxu0 0.0
  %883 = vmatpush1.msra.mxu0 0.0
  %884 = vmatprep.subr.mxu0 0.0
  %885 = vmatpush1.msra.mxu0 0.0
  %886 = vmatprep.subr.mxu0 0.0
  %887 = vmatpush1.msra.mxu0 0.0
  %888 = vmatprep.subr.mxu0 0.0
  %889 = vmatpush1.msra.mxu0 0.0
  %890 = vmatprep.subr.mxu0 0.0
  %891 = vmatpush1.msra.mxu0 0.0
  %892 = vmatprep.subr.mxu0 0.0
  %893 = vmatpush1.msra.mxu0 0.0
  %894 = vmatprep.subr.mxu0 0.0
  %895 = vmatpush1.msra.mxu0 0.0
  %896 = vmatprep.subr.mxu0 0.0
  %897 = vmatpush1.msra.mxu0 0.0
  %898 = vmatprep.subr.mxu0 0.0
  %899 = vmatpush1.msra.mxu0 0.0
  %900 = vmatprep.subr.mxu0 0.0
  %901 = vmatpush1.msra.mxu0 0.0
  %902 = vmatprep.subr.mxu0 0.0
  %903 = vmatpush1.msra.mxu0 0.0
  %904 = vmatprep.subr.mxu0 0.0
  %905 = vmatpush1.msra.mxu0 0.0
  %906 = vmatprep.subr.mxu0 0.0
  %907 = vmatpush1.msra.mxu0 0.0
  %908 = vmatprep.subr.mxu0 0.0
  %909 = vmatpush1.msra.mxu0 0.0
  %910 = vmatprep.subr.mxu0 0.0
  %911 = vmatpush1.msra.mxu0 0.0
  %912 = vmatprep.mubr.f32.mxu0 0.0
  %913 = vmatmul.mubr.f32.gmra.mrb[0].mxu0 %v846
  %v914 = vpop.f32.mrb[0].mxu0
  %v915 = vadd.f32 %v843, %v914
  %v916 = vpop.f32.mrb[0].mxu0
  %917 = vdwg.mxu0
  %919 = vrot.lane.b32.xlu0 %v915, 96
  %v920 = vpop.permute.xlu0 %919
  %v921 = vsel %vm388, %v915, 0
  %v923 = vsel %vm388, %v920, 0
  %925 = vmatprep.subr.mxu0 0.0
  %926 = vmatpush1.xpose.msra.mxu0 %v923
  %927 = vmatprep.subr.mxu0 0.0
  %928 = vmatpush1.xpose.msra.mxu0 0.0
  %929 = vmatprep.subr.mxu0 0.0
  %930 = vmatpush1.xpose.msra.mxu0 0.0
  %931 = vmatprep.subr.mxu0 0.0
  %932 = vmatpush1.xpose.msra.mxu0 0.0
  %933 = vmatprep.subr.mxu0 0.0
  %934 = vmatpush1.xpose.msra.mxu0 0.0
  %935 = vmatprep.subr.mxu0 0.0
  %936 = vmatpush1.xpose.msra.mxu0 0.0
  %937 = vmatprep.subr.mxu0 0.0
  %938 = vmatpush1.xpose.msra.mxu0 0.0
  %939 = vmatprep.subr.mxu0 0.0
  %940 = vmatpush1.xpose.msra.mxu0 0.0
  %941 = vmatprep.subr.mxu0 0.0
  %942 = vmatpush1.xpose.msra.mxu0 0.0
  %943 = vmatprep.subr.mxu0 0.0
  %944 = vmatpush1.xpose.msra.mxu0 0.0
  %945 = vmatprep.subr.mxu0 0.0
  %946 = vmatpush1.xpose.msra.mxu0 0.0
  %947 = vmatprep.subr.mxu0 0.0
  %948 = vmatpush1.xpose.msra.mxu0 0.0
  %949 = vmatprep.subr.mxu0 0.0
  %950 = vmatpush1.xpose.msra.mxu0 0.0
  %951 = vmatprep.subr.mxu0 0.0
  %952 = vmatpush1.xpose.msra.mxu0 0.0
  %953 = vmatprep.subr.mxu0 0.0
  %954 = vmatpush1.xpose.msra.mxu0 0.0
  %955 = vmatprep.subr.mxu0 0.0
  %956 = vmatpush1.xpose.msra.mxu0 0.0
  %957 = vmatprep.subr.mxu0 0.0
  %958 = vmatpush1.xpose.msra.mxu0 0.0
  %959 = vmatprep.subr.mxu0 0.0
  %960 = vmatpush1.xpose.msra.mxu0 0.0
  %961 = vmatprep.subr.mxu0 0.0
  %962 = vmatpush1.xpose.msra.mxu0 0.0
  %963 = vmatprep.subr.mxu0 0.0
  %964 = vmatpush1.xpose.msra.mxu0 0.0
  %965 = vmatprep.subr.mxu0 0.0
  %966 = vmatpush1.xpose.msra.mxu0 0.0
  %967 = vmatprep.subr.mxu0 0.0
  %968 = vmatpush1.xpose.msra.mxu0 0.0
  %969 = vmatprep.subr.mxu0 0.0
  %970 = vmatpush1.xpose.msra.mxu0 0.0
  %971 = vmatprep.subr.mxu0 0.0
  %972 = vmatpush1.xpose.msra.mxu0 0.0
  %973 = vmatprep.subr.mxu0 0.0
  %974 = vmatpush1.xpose.msra.mxu0 0.0
  %975 = vmatprep.subr.mxu0 0.0
  %976 = vmatpush1.xpose.msra.mxu0 0.0
  %977 = vmatprep.subr.mxu0 0.0
  %978 = vmatpush1.xpose.msra.mxu0 0.0
  %979 = vmatprep.subr.mxu0 0.0
  %980 = vmatpush1.xpose.msra.mxu0 0.0
  %981 = vmatprep.subr.mxu0 0.0
  %982 = vmatpush1.xpose.msra.mxu0 0.0
  %983 = vmatprep.subr.mxu0 0.0
  %984 = vmatpush1.xpose.msra.mxu0 0.0
  %985 = vmatprep.subr.mxu0 0.0
  %986 = vmatpush1.xpose.msra.mxu0 0.0
  %987 = vmatprep.subr.mxu0 0.0
  %988 = vmatpush1.xpose.msra.mxu0 0.0
  %989 = vmatprep.mubr.f32.mxu0 0.0
  %990 = vmatmul.mubr.f32.gmra.mrb[0].mxu0 %v921
  %v991 = vpop.f32.mrb[0].mxu0
  %v992 = vadd.f32 0.0, %v991
  %v993 = vpop.f32.mrb[0].mxu0
  %994 = vdwg.mxu0
  %v995 = vmul.f32 %v992, 0.17677669
  %v996 = vlaneseq
  %v997 = vshrl.u32 %v996, 7
  %vm998 = vcmp.lt.s32.totalorder %v997, 0
  %v999 = vsub.s32 0, %v997
  %v1000 = vsel %vm998, %v999, %v997
  %v1001 = vshrl.u32 %v1000, 1
  %v1002 = vand.u32 %v1000, 1
  %v1003 = vsub.s32 0, %v1002
  %v1004 = vsel %vm998, %v1003, %v1002
  %vm1005 = vcmp.ne.s32.totalorder %v1004, 0
  %vm1006 = vcmp.lt.s32.totalorder %v1004, 0
  %vm1007 = vmand %vm1006, %vm1005
  %v1008 = vadd.s32 %v1004, 2
  %v1009 = vsel %vm1007, %v1008, %v1004
  %vm1010 = vcmp.lt.s32.totalorder %v44, 0
  %v1011 = vsub.s32 0, %v44
  %v1012 = vsel %vm1010, %v1011, %v44
  %v1013 = vshrl.u32 %v1012, 1
  %v1014 = vand.u32 %v1012, 1
  %v1015 = vsub.s32 0, %v1014
  %v1016 = vsel %vm1010, %v1015, %v1014
  %vm1017 = vcmp.ne.s32.totalorder %v1016, 0
  %vm1018 = vcmp.lt.s32.totalorder %v1016, 0
  %vm1019 = vmand %vm1018, %vm1017
  %v1020 = vadd.s32 %v1016, 2
  %v1021 = vsel %vm1019, %v1020, %v1016
  %vm1022 = vcmp.eq.s32.totalorder %v1009, %v1021
  %v1023 = vsel %vm1022, %v995, -1e+30
  %vm1024 = vcmask 64512
  %v1025 = vsel %vm1024, %v1023, -inf
  %1026 = vmax.xlane.f32.xlu0 %v1025
  %v1027 = vpop.xlane.xlu0 %1026
  %v1028 = vsub.f32 %v1023, %v1027
  %v1029 = vmul.f32 %v1028, 1.442695
  %v1030 = vpow.pop %v1029
  %v1031 = vsel %vm1024, %v1030, 0.0
  %1032 = vadd.xlane.f32.xlu0 %v1031
  %v1033 = vpop.xlane.xlu0 %1032
  %v1034 = vrcp.pop %v1033
  %v1035 = vmul.f32 %v1030, %v1034
  %1036 = vrot.lane.b32.xlu0 %v915, 64
  %v1037 = vpop.permute.xlu0 %1036
  %v1040 = vsel %vm1024, %v1035, 0
  %1042 = vmatprep.subr.mxu0 0.0
  %1043 = vmatpush1.msra.mxu0 %v1037
  %1044 = vmatprep.subr.mxu0 0.0
  %1045 = vmatpush1.msra.mxu0 0.0
  %1046 = vmatprep.subr.mxu0 0.0
  %1047 = vmatpush1.msra.mxu0 0.0
  %1048 = vmatprep.subr.mxu0 0.0
  %1049 = vmatpush1.msra.mxu0 0.0
  %1050 = vmatprep.subr.mxu0 0.0
  %1051 = vmatpush1.msra.mxu0 0.0
  %1052 = vmatprep.subr.mxu0 0.0
  %1053 = vmatpush1.msra.mxu0 0.0
  %1054 = vmatprep.subr.mxu0 0.0
  %1055 = vmatpush1.msra.mxu0 0.0
  %1056 = vmatprep.subr.mxu0 0.0
  %1057 = vmatpush1.msra.mxu0 0.0
  %1058 = vmatprep.subr.mxu0 0.0
  %1059 = vmatpush1.msra.mxu0 0.0
  %1060 = vmatprep.subr.mxu0 0.0
  %1061 = vmatpush1.msra.mxu0 0.0
  %1062 = vmatprep.subr.mxu0 0.0
  %1063 = vmatpush1.msra.mxu0 0.0
  %1064 = vmatprep.subr.mxu0 0.0
  %1065 = vmatpush1.msra.mxu0 0.0
  %1066 = vmatprep.subr.mxu0 0.0
  %1067 = vmatpush1.msra.mxu0 0.0
  %1068 = vmatprep.subr.mxu0 0.0
  %1069 = vmatpush1.msra.mxu0 0.0
  %1070 = vmatprep.subr.mxu0 0.0
  %1071 = vmatpush1.msra.mxu0 0.0
  %1072 = vmatprep.subr.mxu0 0.0
  %1073 = vmatpush1.msra.mxu0 0.0
  %1074 = vmatprep.subr.mxu0 0.0
  %1075 = vmatpush1.msra.mxu0 0.0
  %1076 = vmatprep.subr.mxu0 0.0
  %1077 = vmatpush1.msra.mxu0 0.0
  %1078 = vmatprep.subr.mxu0 0.0
  %1079 = vmatpush1.msra.mxu0 0.0
  %1080 = vmatprep.subr.mxu0 0.0
  %1081 = vmatpush1.msra.mxu0 0.0
  %1082 = vmatprep.subr.mxu0 0.0
  %1083 = vmatpush1.msra.mxu0 0.0
  %1084 = vmatprep.subr.mxu0 0.0
  %1085 = vmatpush1.msra.mxu0 0.0
  %1086 = vmatprep.subr.mxu0 0.0
  %1087 = vmatpush1.msra.mxu0 0.0
  %1088 = vmatprep.subr.mxu0 0.0
  %1089 = vmatpush1.msra.mxu0 0.0
  %1090 = vmatprep.subr.mxu0 0.0
  %1091 = vmatpush1.msra.mxu0 0.0
  %1092 = vmatprep.subr.mxu0 0.0
  %1093 = vmatpush1.msra.mxu0 0.0
  %1094 = vmatprep.subr.mxu0 0.0
  %1095 = vmatpush1.msra.mxu0 0.0
  %1096 = vmatprep.subr.mxu0 0.0
  %1097 = vmatpush1.msra.mxu0 0.0
  %1098 = vmatprep.subr.mxu0 0.0
  %1099 = vmatpush1.msra.mxu0 0.0
  %1100 = vmatprep.subr.mxu0 0.0
  %1101 = vmatpush1.msra.mxu0 0.0
  %1102 = vmatprep.subr.mxu0 0.0
  %1103 = vmatpush1.msra.mxu0 0.0
  %1104 = vmatprep.subr.mxu0 0.0
  %1105 = vmatpush1.msra.mxu0 0.0
  %1106 = vmatprep.mubr.f32.mxu0 0.0
  %1107 = vmatmul.mubr.f32.gmra.mrb[0].mxu0 %v1040
  %v1108 = vpop.f32.mrb[0].mxu0
  %v1109 = vadd.f32 0.0, %v1108
  %v1110 = vpop.f32.mrb[0].mxu0
  %1111 = vdwg.mxu0
  %v1112 = vld [vmem:[%s9] sm:$0x1]
  %v1114 = vlaneseq
  %v1115 = vshrl.u32 %v1114, 7
  %v1116 = vsub.s32 0, %v1115
  %v1117 = vrot.slane %v1112, %v1116
  %v1119 = vadd.f32 %v1117, 0.0
  %v1120 = vld [vmem:[%s8] sm:$0xff]
  %v1121 = vld [vmem:[%s8 + $0x8] sm:$0xff]
  %v1122 = vld [vmem:[%s8 + $0x10] sm:$0xff]
  %v1123 = vld [vmem:[%s8 + $0x18] sm:$0xff]
  %v1125 = vsel %vm388, %v1109, 0
  %1127 = vmatprep.subr.mxu0 0.0
  %1128 = vmatpush1.msra.mxu0 %v1120
  %1129 = vmatprep.subr.mxu0 0.0
  %1130 = vmatpush1.msra.mxu0 %v1121
  %1131 = vmatprep.subr.mxu0 0.0
  %1132 = vmatpush1.msra.mxu0 %v1122
  %1133 = vmatprep.subr.mxu0 0.0
  %1134 = vmatpush1.msra.mxu0 %v1123
  %1135 = vmatprep.subr.mxu0 0.0
  %1136 = vmatpush1.msra.mxu0 0.0
  %1137 = vmatprep.subr.mxu0 0.0
  %1138 = vmatpush1.msra.mxu0 0.0
  %1139 = vmatprep.subr.mxu0 0.0
  %1140 = vmatpush1.msra.mxu0 0.0
  %1141 = vmatprep.subr.mxu0 0.0
  %1142 = vmatpush1.msra.mxu0 0.0
  %1143 = vmatprep.subr.mxu0 0.0
  %1144 = vmatpush1.msra.mxu0 0.0
  %1145 = vmatprep.subr.mxu0 0.0
  %1146 = vmatpush1.msra.mxu0 0.0
  %1147 = vmatprep.subr.mxu0 0.0
  %1148 = vmatpush1.msra.mxu0 0.0
  %1149 = vmatprep.subr.mxu0 0.0
  %1150 = vmatpush1.msra.mxu0 0.0
  %1151 = vmatprep.subr.mxu0 0.0
  %1152 = vmatpush1.msra.mxu0 0.0
  %1153 = vmatprep.subr.mxu0 0.0
  %1154 = vmatpush1.msra.mxu0 0.0
  %1155 = vmatprep.subr.mxu0 0.0
  %1156 = vmatpush1.msra.mxu0 0.0
  %1157 = vmatprep.subr.mxu0 0.0
  %1158 = vmatpush1.msra.mxu0 0.0
  %1159 = vmatprep.subr.mxu0 0.0
  %1160 = vmatpush1.msra.mxu0 0.0
  %1161 = vmatprep.subr.mxu0 0.0
  %1162 = vmatpush1.msra.mxu0 0.0
  %1163 = vmatprep.subr.mxu0 0.0
  %1164 = vmatpush1.msra.mxu0 0.0
  %1165 = vmatprep.subr.mxu0 0.0
  %1166 = vmatpush1.msra.mxu0 0.0
  %1167 = vmatprep.subr.mxu0 0.0
  %1168 = vmatpush1.msra.mxu0 0.0
  %1169 = vmatprep.subr.mxu0 0.0
  %1170 = vmatpush1.msra.mxu0 0.0
  %1171 = vmatprep.subr.mxu0 0.0
  %1172 = vmatpush1.msra.mxu0 0.0
  %1173 = vmatprep.subr.mxu0 0.0
  %1174 = vmatpush1.msra.mxu0 0.0
  %1175 = vmatprep.subr.mxu0 0.0
  %1176 = vmatpush1.msra.mxu0 0.0
  %1177 = vmatprep.subr.mxu0 0.0
  %1178 = vmatpush1.msra.mxu0 0.0
  %1179 = vmatprep.subr.mxu0 0.0
  %1180 = vmatpush1.msra.mxu0 0.0
  %1181 = vmatprep.subr.mxu0 0.0
  %1182 = vmatpush1.msra.mxu0 0.0
  %1183 = vmatprep.subr.mxu0 0.0
  %1184 = vmatpush1.msra.mxu0 0.0
  %1185 = vmatprep.subr.mxu0 0.0
  %1186 = vmatpush1.msra.mxu0 0.0
  %1187 = vmatprep.subr.mxu0 0.0
  %1188 = vmatpush1.msra.mxu0 0.0
  %1189 = vmatprep.subr.mxu0 0.0
  %1190 = vmatpush1.msra.mxu0 0.0
  %1191 = vmatprep.mubr.f32.mxu0 0.0
  %1192 = vmatmul.mubr.f32.gmra.mrb[0].mxu0 %v1125
  %v1193 = vpop.f32.mrb[0].mxu0
  %v1194 = vadd.f32 0.0, %v1193
  %v1195 = vpop.f32.mrb[0].mxu0
  %1196 = vdwg.mxu0
  %v1197 = vadd.f32 %v1119, %v1194
  %s1198 = scalar_lea.vmem %s8, 32
  %v1199 = vld [vmem:[%s1198] sm:$0xff]
  %v1200 = vld [vmem:[%s1198 + $0x8] sm:$0xff]
  %v1201 = vld [vmem:[%s1198 + $0x10] sm:$0xff]
  %v1202 = vld [vmem:[%s1198 + $0x18] sm:$0xff]
  %v1203 = vrot.slane %v1109, 2
  %v1204 = vsel %vm388, %v1203, 0
  %1206 = vmatprep.subr.mxu0 0.0
  %1207 = vmatpush1.msra.mxu0 %v1199
  %1208 = vmatprep.subr.mxu0 0.0
  %1209 = vmatpush1.msra.mxu0 %v1200
  %1210 = vmatprep.subr.mxu0 0.0
  %1211 = vmatpush1.msra.mxu0 %v1201
  %1212 = vmatprep.subr.mxu0 0.0
  %1213 = vmatpush1.msra.mxu0 %v1202
  %1214 = vmatprep.subr.mxu0 0.0
  %1215 = vmatpush1.msra.mxu0 0.0
  %1216 = vmatprep.subr.mxu0 0.0
  %1217 = vmatpush1.msra.mxu0 0.0
  %1218 = vmatprep.subr.mxu0 0.0
  %1219 = vmatpush1.msra.mxu0 0.0
  %1220 = vmatprep.subr.mxu0 0.0
  %1221 = vmatpush1.msra.mxu0 0.0
  %1222 = vmatprep.subr.mxu0 0.0
  %1223 = vmatpush1.msra.mxu0 0.0
  %1224 = vmatprep.subr.mxu0 0.0
  %1225 = vmatpush1.msra.mxu0 0.0
  %1226 = vmatprep.subr.mxu0 0.0
  %1227 = vmatpush1.msra.mxu0 0.0
  %1228 = vmatprep.subr.mxu0 0.0
  %1229 = vmatpush1.msra.mxu0 0.0
  %1230 = vmatprep.subr.mxu0 0.0
  %1231 = vmatpush1.msra.mxu0 0.0
  %1232 = vmatprep.subr.mxu0 0.0
  %1233 = vmatpush1.msra.mxu0 0.0
  %1234 = vmatprep.subr.mxu0 0.0
  %1235 = vmatpush1.msra.mxu0 0.0
  %1236 = vmatprep.subr.mxu0 0.0
  %1237 = vmatpush1.msra.mxu0 0.0
  %1238 = vmatprep.subr.mxu0 0.0
  %1239 = vmatpush1.msra.mxu0 0.0
  %1240 = vmatprep.subr.mxu0 0.0
  %1241 = vmatpush1.msra.mxu0 0.0
  %1242 = vmatprep.subr.mxu0 0.0
  %1243 = vmatpush1.msra.mxu0 0.0
  %1244 = vmatprep.subr.mxu0 0.0
  %1245 = vmatpush1.msra.mxu0 0.0
  %1246 = vmatprep.subr.mxu0 0.0
  %1247 = vmatpush1.msra.mxu0 0.0
  %1248 = vmatprep.subr.mxu0 0.0
  %1249 = vmatpush1.msra.mxu0 0.0
  %1250 = vmatprep.subr.mxu0 0.0
  %1251 = vmatpush1.msra.mxu0 0.0
  %1252 = vmatprep.subr.mxu0 0.0
  %1253 = vmatpush1.msra.mxu0 0.0
  %1254 = vmatprep.subr.mxu0 0.0
  %1255 = vmatpush1.msra.mxu0 0.0
  %1256 = vmatprep.subr.mxu0 0.0
  %1257 = vmatpush1.msra.mxu0 0.0
  %1258 = vmatprep.subr.mxu0 0.0
  %1259 = vmatpush1.msra.mxu0 0.0
  %1260 = vmatprep.subr.mxu0 0.0
  %1261 = vmatpush1.msra.mxu0 0.0
  %1262 = vmatprep.subr.mxu0 0.0
  %1263 = vmatpush1.msra.mxu0 0.0
  %1264 = vmatprep.subr.mxu0 0.0
  %1265 = vmatpush1.msra.mxu0 0.0
  %1266 = vmatprep.subr.mxu0 0.0
  %1267 = vmatpush1.msra.mxu0 0.0
  %1268 = vmatprep.subr.mxu0 0.0
  %1269 = vmatpush1.msra.mxu0 0.0
  %1270 = vmatprep.mubr.f32.mxu0 0.0
  %1271 = vmatmul.mubr.f32.gmra.mrb[0].mxu0 %v1204
  %v1272 = vpop.f32.mrb[0].mxu0
  %v1273 = vadd.f32 0.0, %v1272
  %v1274 = vpop.f32.mrb[0].mxu0
  %1275 = vdwg.mxu0
  %v1276 = vadd.f32 %v1197, %v1273
  %s1277 = scalar_lea.vmem %s8, 64
  %v1278 = vld [vmem:[%s1277] sm:$0xff]
  %v1279 = vld [vmem:[%s1277 + $0x8] sm:$0xff]
  %v1280 = vld [vmem:[%s1277 + $0x10] sm:$0xff]
  %v1281 = vld [vmem:[%s1277 + $0x18] sm:$0xff]
  %v1282 = vrot.slane %v1109, 4
  %v1283 = vsel %vm388, %v1282, 0
  %1285 = vmatprep.subr.mxu0 0.0
  %1286 = vmatpush1.msra.mxu0 %v1278
  %1287 = vmatprep.subr.mxu0 0.0
  %1288 = vmatpush1.msra.mxu0 %v1279
  %1289 = vmatprep.subr.mxu0 0.0
  %1290 = vmatpush1.msra.mxu0 %v1280
  %1291 = vmatprep.subr.mxu0 0.0
  %1292 = vmatpush1.msra.mxu0 %v1281
  %1293 = vmatprep.subr.mxu0 0.0
  %1294 = vmatpush1.msra.mxu0 0.0
  %1295 = vmatprep.subr.mxu0 0.0
  %1296 = vmatpush1.msra.mxu0 0.0
  %1297 = vmatprep.subr.mxu0 0.0
  %1298 = vmatpush1.msra.mxu0 0.0
  %1299 = vmatprep.subr.mxu0 0.0
  %1300 = vmatpush1.msra.mxu0 0.0
  %1301 = vmatprep.subr.mxu0 0.0
  %1302 = vmatpush1.msra.mxu0 0.0
  %1303 = vmatprep.subr.mxu0 0.0
  %1304 = vmatpush1.msra.mxu0 0.0
  %1305 = vmatprep.subr.mxu0 0.0
  %1306 = vmatpush1.msra.mxu0 0.0
  %1307 = vmatprep.subr.mxu0 0.0
  %1308 = vmatpush1.msra.mxu0 0.0
  %1309 = vmatprep.subr.mxu0 0.0
  %1310 = vmatpush1.msra.mxu0 0.0
  %1311 = vmatprep.subr.mxu0 0.0
  %1312 = vmatpush1.msra.mxu0 0.0
  %1313 = vmatprep.subr.mxu0 0.0
  %1314 = vmatpush1.msra.mxu0 0.0
  %1315 = vmatprep.subr.mxu0 0.0
  %1316 = vmatpush1.msra.mxu0 0.0
  %1317 = vmatprep.subr.mxu0 0.0
  %1318 = vmatpush1.msra.mxu0 0.0
  %1319 = vmatprep.subr.mxu0 0.0
  %1320 = vmatpush1.msra.mxu0 0.0
  %1321 = vmatprep.subr.mxu0 0.0
  %1322 = vmatpush1.msra.mxu0 0.0
  %1323 = vmatprep.subr.mxu0 0.0
  %1324 = vmatpush1.msra.mxu0 0.0
  %1325 = vmatprep.subr.mxu0 0.0
  %1326 = vmatpush1.msra.mxu0 0.0
  %1327 = vmatprep.subr.mxu0 0.0
  %1328 = vmatpush1.msra.mxu0 0.0
  %1329 = vmatprep.subr.mxu0 0.0
  %1330 = vmatpush1.msra.mxu0 0.0
  %1331 = vmatprep.subr.mxu0 0.0
  %1332 = vmatpush1.msra.mxu0 0.0
  %1333 = vmatprep.subr.mxu0 0.0
  %1334 = vmatpush1.msra.mxu0 0.0
  %1335 = vmatprep.subr.mxu0 0.0
  %1336 = vmatpush1.msra.mxu0 0.0
  %1337 = vmatprep.subr.mxu0 0.0
  %1338 = vmatpush1.msra.mxu0 0.0
  %1339 = vmatprep.subr.mxu0 0.0
  %1340 = vmatpush1.msra.mxu0 0.0
  %1341 = vmatprep.subr.mxu0 0.0
  %1342 = vmatpush1.msra.mxu0 0.0
  %1343 = vmatprep.subr.mxu0 0.0
  %1344 = vmatpush1.msra.mxu0 0.0
  %1345 = vmatprep.subr.mxu0 0.0
  %1346 = vmatpush1.msra.mxu0 0.0
  %1347 = vmatprep.subr.mxu0 0.0
  %1348 = vmatpush1.msra.mxu0 0.0
  %1349 = vmatprep.mubr.f32.mxu0 0.0
  %1350 = vmatmul.mubr.f32.gmra.mrb[0].mxu0 %v1283
  %v1351 = vpop.f32.mrb[0].mxu0
  %v1352 = vadd.f32 0.0, %v1351
  %v1353 = vpop.f32.mrb[0].mxu0
  %1354 = vdwg.mxu0
  %v1355 = vadd.f32 %v1276, %v1352
  %s1356 = scalar_lea.vmem %s8, 96
  %v1357 = vld [vmem:[%s1356] sm:$0xff]
  %v1358 = vld [vmem:[%s1356 + $0x8] sm:$0xff]
  %v1359 = vld [vmem:[%s1356 + $0x10] sm:$0xff]
  %v1360 = vld [vmem:[%s1356 + $0x18] sm:$0xff]
  %v1361 = vrot.slane %v1109, 6
  %v1362 = vsel %vm388, %v1361, 0
  %1364 = vmatprep.subr.mxu0 0.0
  %1365 = vmatpush1.msra.mxu0 %v1357
  %1366 = vmatprep.subr.mxu0 0.0
  %1367 = vmatpush1.msra.mxu0 %v1358
  %1368 = vmatprep.subr.mxu0 0.0
  %1369 = vmatpush1.msra.mxu0 %v1359
  %1370 = vmatprep.subr.mxu0 0.0
  %1371 = vmatpush1.msra.mxu0 %v1360
  %1372 = vmatprep.subr.mxu0 0.0
  %1373 = vmatpush1.msra.mxu0 0.0
  %1374 = vmatprep.subr.mxu0 0.0
  %1375 = vmatpush1.msra.mxu0 0.0
  %1376 = vmatprep.subr.mxu0 0.0
  %1377 = vmatpush1.msra.mxu0 0.0
  %1378 = vmatprep.subr.mxu0 0.0
  %1379 = vmatpush1.msra.mxu0 0.0
  %1380 = vmatprep.subr.mxu0 0.0
  %1381 = vmatpush1.msra.mxu0 0.0
  %1382 = vmatprep.subr.mxu0 0.0
  %1383 = vmatpush1.msra.mxu0 0.0
  %1384 = vmatprep.subr.mxu0 0.0
  %1385 = vmatpush1.msra.mxu0 0.0
  %1386 = vmatprep.subr.mxu0 0.0
  %1387 = vmatpush1.msra.mxu0 0.0
  %1388 = vmatprep.subr.mxu0 0.0
  %1389 = vmatpush1.msra.mxu0 0.0
  %1390 = vmatprep.subr.mxu0 0.0
  %1391 = vmatpush1.msra.mxu0 0.0
  %1392 = vmatprep.subr.mxu0 0.0
  %1393 = vmatpush1.msra.mxu0 0.0
  %1394 = vmatprep.subr.mxu0 0.0
  %1395 = vmatpush1.msra.mxu0 0.0
  %1396 = vmatprep.subr.mxu0 0.0
  %1397 = vmatpush1.msra.mxu0 0.0
  %1398 = vmatprep.subr.mxu0 0.0
  %1399 = vmatpush1.msra.mxu0 0.0
  %1400 = vmatprep.subr.mxu0 0.0
  %1401 = vmatpush1.msra.mxu0 0.0
  %1402 = vmatprep.subr.mxu0 0.0
  %1403 = vmatpush1.msra.mxu0 0.0
  %1404 = vmatprep.subr.mxu0 0.0
  %1405 = vmatpush1.msra.mxu0 0.0
  %1406 = vmatprep.subr.mxu0 0.0
  %1407 = vmatpush1.msra.mxu0 0.0
  %1408 = vmatprep.subr.mxu0 0.0
  %1409 = vmatpush1.msra.mxu0 0.0
  %1410 = vmatprep.subr.mxu0 0.0
  %1411 = vmatpush1.msra.mxu0 0.0
  %1412 = vmatprep.subr.mxu0 0.0
  %1413 = vmatpush1.msra.mxu0 0.0
  %1414 = vmatprep.subr.mxu0 0.0
  %1415 = vmatpush1.msra.mxu0 0.0
  %1416 = vmatprep.subr.mxu0 0.0
  %1417 = vmatpush1.msra.mxu0 0.0
  %1418 = vmatprep.subr.mxu0 0.0
  %1419 = vmatpush1.msra.mxu0 0.0
  %1420 = vmatprep.subr.mxu0 0.0
  %1421 = vmatpush1.msra.mxu0 0.0
  %1422 = vmatprep.subr.mxu0 0.0
  %1423 = vmatpush1.msra.mxu0 0.0
  %1424 = vmatprep.subr.mxu0 0.0
  %1425 = vmatpush1.msra.mxu0 0.0
  %1426 = vmatprep.subr.mxu0 0.0
  %1427 = vmatpush1.msra.mxu0 0.0
  %1428 = vmatprep.mubr.f32.mxu0 0.0
  %1429 = vmatmul.mubr.f32.gmra.mrb[0].mxu0 %v1362
  %v1430 = vpop.f32.mrb[0].mxu0
  %v1431 = vadd.f32 0.0, %v1430
  %v1432 = vpop.f32.mrb[0].mxu0
  %1433 = vdwg.mxu0
  %v1434 = vadd.f32 %v1355, %v1431
  %v1435 = vmax.f32 %v1434, 0.0
  %v1436 = vld [vmem:[%s10] sm:$0xff]
  %v1437 = vld [vmem:[%s10 + $0x8] sm:$0xff]
  %v1438 = vld [vmem:[%s10 + $0x10] sm:$0xff]
  %v1439 = vld [vmem:[%s10 + $0x18] sm:$0xff]
  %v1440 = vld [vmem:[#allocation2] sm:$0x1]
  %v1442 = vlaneseq
  %v1443 = vshrl.u32 %v1442, 7
  %v1444 = vsub.s32 0, %v1443
  %v1445 = vrot.slane %v1440, %v1444
  %v1448 = vsel %vm388, %v1435, 0
  %1450 = vmatprep.subr.mxu0 0.0
  %1451 = vmatpush1.msra.mxu0 %v1436
  %1452 = vmatprep.subr.mxu0 0.0
  %1453 = vmatpush1.msra.mxu0 %v1437
  %1454 = vmatprep.subr.mxu0 0.0
  %1455 = vmatpush1.msra.mxu0 %v1438
  %1456 = vmatprep.subr.mxu0 0.0
  %1457 = vmatpush1.msra.mxu0 %v1439
  %1458 = vmatprep.subr.mxu0 0.0
  %1459 = vmatpush1.msra.mxu0 0.0
  %1460 = vmatprep.subr.mxu0 0.0
  %1461 = vmatpush1.msra.mxu0 0.0
  %1462 = vmatprep.subr.mxu0 0.0
  %1463 = vmatpush1.msra.mxu0 0.0
  %1464 = vmatprep.subr.mxu0 0.0
  %1465 = vmatpush1.msra.mxu0 0.0
  %1466 = vmatprep.subr.mxu0 0.0
  %1467 = vmatpush1.msra.mxu0 0.0
  %1468 = vmatprep.subr.mxu0 0.0
  %1469 = vmatpush1.msra.mxu0 0.0
  %1470 = vmatprep.subr.mxu0 0.0
  %1471 = vmatpush1.msra.mxu0 0.0
  %1472 = vmatprep.subr.mxu0 0.0
  %1473 = vmatpush1.msra.mxu0 0.0
  %1474 = vmatprep.subr.mxu0 0.0
  %1475 = vmatpush1.msra.mxu0 0.0
  %1476 = vmatprep.subr.mxu0 0.0
  %1477 = vmatpush1.msra.mxu0 0.0
  %1478 = vmatprep.subr.mxu0 0.0
  %1479 = vmatpush1.msra.mxu0 0.0
  %1480 = vmatprep.subr.mxu0 0.0
  %1481 = vmatpush1.msra.mxu0 0.0
  %1482 = vmatprep.subr.mxu0 0.0
  %1483 = vmatpush1.msra.mxu0 0.0
  %1484 = vmatprep.subr.mxu0 0.0
  %1485 = vmatpush1.msra.mxu0 0.0
  %1486 = vmatprep.subr.mxu0 0.0
  %1487 = vmatpush1.msra.mxu0 0.0
  %1488 = vmatprep.subr.mxu0 0.0
  %1489 = vmatpush1.msra.mxu0 0.0
  %1490 = vmatprep.subr.mxu0 0.0
  %1491 = vmatpush1.msra.mxu0 0.0
  %1492 = vmatprep.subr.mxu0 0.0
  %1493 = vmatpush1.msra.mxu0 0.0
  %1494 = vmatprep.subr.mxu0 0.0
  %1495 = vmatpush1.msra.mxu0 0.0
  %1496 = vmatprep.subr.mxu0 0.0
  %1497 = vmatpush1.msra.mxu0 0.0
  %1498 = vmatprep.subr.mxu0 0.0
  %1499 = vmatpush1.msra.mxu0 0.0
  %1500 = vmatprep.subr.mxu0 0.0
  %1501 = vmatpush1.msra.mxu0 0.0
  %1502 = vmatprep.subr.mxu0 0.0
  %1503 = vmatpush1.msra.mxu0 0.0
  %1504 = vmatprep.subr.mxu0 0.0
  %1505 = vmatpush1.msra.mxu0 0.0
  %1506 = vmatprep.subr.mxu0 0.0
  %1507 = vmatpush1.msra.mxu0 0.0
  %1508 = vmatprep.subr.mxu0 0.0
  %1509 = vmatpush1.msra.mxu0 0.0
  %1510 = vmatprep.subr.mxu0 0.0
  %1511 = vmatpush1.msra.mxu0 0.0
  %1512 = vmatprep.subr.mxu0 0.0
  %1513 = vmatpush1.msra.mxu0 0.0
  %1514 = vmatprep.mubr.f32.mxu0 0.0
  %1515 = vmatmul.mubr.f32.gmra.mrb[0].mxu0 %v1448
  %v1516 = vpop.f32.mrb[0].mxu0
  %v1517 = vadd.f32 %v1445, %v1516
  %v1518 = vpop.f32.mrb[0].mxu0
  %1519 = vdwg.mxu0
  %vm1520 = vcmask 1024
  %1521 = vst.msk [vmem:[%s12] sm:$0x3] %vm1520, %v1517
  // Predicated region
  $region50: #{tpu_custom_call.1} parent=0 // pred_check
    _
  $region51: #{tpu_custom_call.1} parent=0 // pred_check_branch
    %1523 = sbr.rel (0) target = $region53
  $region52: #{tpu_custom_call.1} parent=0 // pred_region
    _
  $region53: #{tpu_custom_call.1} parent=0 // pred_fallthru
    _
  // Predicated region
  $region54: #{tpu_custom_call.1} parent=0 // pred_check
    _
  $region55: #{tpu_custom_call.1} parent=0 // pred_check_branch
    %1525 = sbr.rel (0) target = $region57
  $region56: #{tpu_custom_call.1} parent=0 // pred_region
    _
  $region57: #{tpu_custom_call.1} parent=0 // pred_fallthru
    _

</llo_original>
